<compile_context>
chip_gen: v7x
topology: tpu7x:2x2x1
jax: 0.10.0
libtpu: 0.0.40
codegen_flags: <defaults>
</compile_context>

<pallas_src>
import jax
import jax.numpy as jnp
from jax.experimental import pallas as pl
from jax.experimental.pallas import tpu as pltpu

_SUBLANES = 8          # f32 sublane tile height
_BF16_ROW_ALIGN = 16   # bf16 packs 2 rows per 32-bit sublane -> 16-row blocks


def _ceil_to(x, m):
    return (x + m - 1) // m * m


def _pad_rows(w, rows):
    return jnp.pad(w, ((0, rows - w.shape[0]), (0, 0)))


# ------------------------------ fused kernel ----------------------------------
def _make_wavefront_lstm_fc_kernel(T, Bp, H, L, layer_slices):
    """Kernel: (x (T*Bp, Dp) bf16, w_slab bf16, b (L,4H) f32, w_fc, b_fc)
    -> (Bp, O) f32.

    layer_slices[l] = (ih_off, ih_k, hh_off): static row offsets/extents of
    layer l's gate-permuted W_ih / W_hh blocks inside w_slab.  All offsets are
    multiples of 16, so every bf16 sub-block load is tile aligned.
    """
    H4 = 4 * H

    def kernel(x_ref, w_ref, b_ref, wfc_ref, bfc_ref, out_ref, xp_scr):
        f32, bf16 = jnp.float32, jnp.bfloat16

        # Hoisted, once-per-kernel weight-block loads and bias broadcasts
        # (JAX does not CSE broadcasts -> keep them out of the recurrence).
        w_ih, w_hh, bias = [], [], [None]
        for l, (ih_off, ih_k, hh_off) in enumerate(layer_slices):
            w_ih.append(w_ref[ih_off:ih_off + ih_k, :])      # (ih_k, 4H) bf16
            w_hh.append(w_ref[hh_off:hh_off + H, :])         # (H,   4H) bf16
            if l > 0:
                bias.append(jnp.broadcast_to(b_ref[l:l + 1, :], (Bp, H4)))

        # Layer 0: input projection for ALL timesteps in one batched MXU pass
        # (no recurrent dependence), bias folded in.  Stored in an aligned
        # (T*Bp, 4H) VMEM slab; each per-step read below is a full (8,128)
        # tile at an 8-aligned sublane offset.
        xp_scr[...] = jnp.dot(x_ref[...], w_ih[0],
                              preferred_element_type=f32) + b_ref[0:1, :]

        h = [jnp.zeros((Bp, H), f32) for _ in range(L)]
        c = [jnp.zeros((Bp, H), f32) for _ in range(L)]

        def lstm_cell(l, gates):
            # Gate columns are pre-permuted to i|f|o|g: one sigmoid over the
            # first 3H columns + one tanh over the last H.
            sg = jax.nn.sigmoid(gates[:, :3 * H])
            g_g = jnp.tanh(gates[:, 3 * H:])
            i_g = sg[:, 0 * H:1 * H]
            f_g = sg[:, 1 * H:2 * H]
            o_g = sg[:, 2 * H:3 * H]
            c[l] = f_g * c[l] + i_g * g_g
            h[l] = o_g * jnp.tanh(c[l])

        # Wavefront over (layer, time): cell (l, t) runs at wavefront s = t+l.
        # Layers are emitted top-down within a wavefront so h[l-1] still holds
        # the layer-below output of timestep t when layer l consumes it.
        # Critical path: T + L - 1 dependent steps instead of T * L.
        # (Statically unrolled: T, L are small compile-time constants; use
        #  lax.fori_loop for large T to bound vreg live ranges.)
        for s in range(T + L - 1):
            for l in range(L - 1, -1, -1):
                t = s - l
                if t < 0 or t >= T:
                    continue
                if l == 0:
                    gates = xp_scr[t * Bp:(t + 1) * Bp, :] + jnp.dot(
                        h[0].astype(bf16), w_hh[0],
                        preferred_element_type=f32)
                else:
                    # Per-step input projection from the just-produced hidden
                    # state of the layer below; bf16 operands on the MXU with
                    # f32 accumulation.  The two dots are independent.
                    gates = (jnp.dot(h[l - 1].astype(bf16), w_ih[l],
                                     preferred_element_type=f32)
                             + jnp.dot(h[l].astype(bf16), w_hh[l],
                                       preferred_element_type=f32)
                             + bias[l])
                lstm_cell(l, gates)

        # Final FC on the top layer's last-timestep hidden state (kept f32).
        out_ref[...] = (jnp.dot(h[L - 1], wfc_ref[...],
                                preferred_element_type=f32)
                        + bfc_ref[...]).astype(out_ref.dtype)

    return kernel


# ------------------------------ param packing ---------------------------------
def _prepare_kernel_params(layers, w_fc, b_fc):
    """Pack per-layer (W_ih, W_hh, b) into one gate-permuted bf16 weight slab
    plus one f32 bias table.  `layers` holds PyTorch-equivalent params stored
    transposed: W_ih (D_in, 4H), W_hh (H, 4H), b = b_ih + b_hh (1, 4H), gate
    order i|f|g|o."""
    H = layers[0][1].shape[0]
    # i|f|g|o -> i|f|o|g column permutation (see kernel activation split).
    perm = jnp.concatenate([jnp.arange(2 * H), jnp.arange(3 * H, 4 * H),
                            jnp.arange(2 * H, 3 * H)])
    blocks, biases, layer_slices = [], [], []
    off = 0
    for l, (w_ih, w_hh, b) in enumerate(layers):
        d_in = w_ih.shape[0]
        ih_res = _ceil_to(d_in if l == 0 else H, _BF16_ROW_ALIGN)
        hh_res = _ceil_to(H, _BF16_ROW_ALIGN)
        ih_k = ih_res if l == 0 else H   # layer 0 contracts over padded D
        blocks.append(_pad_rows(w_ih[:, perm], ih_res))
        blocks.append(_pad_rows(w_hh[:, perm], hh_res))
        biases.append(b[:, perm])
        layer_slices.append((off, ih_k, off + ih_res))
        off += ih_res + hh_res
    w_slab = jnp.concatenate(blocks, axis=0).astype(jnp.bfloat16)
    b_all = jnp.concatenate(biases, axis=0).astype(jnp.float32)     # (L, 4H)
    d_in_pad = layer_slices[0][1]
    return (w_slab, b_all, w_fc.astype(jnp.float32),
            b_fc.astype(jnp.float32), tuple(layer_slices), d_in_pad)


# --------------------------------- wrapper -------------------------------------
def fused_lstm_fc(x_btd, kparams, hidden_size):
    """x_btd: (B, T, D) batch_first -> (B, output_size)."""
    w_slab, b_all, w_fc, b_fc, layer_slices, d_in_pad = kparams
    B, T, D = x_btd.shape
    H = hidden_size
    O = w_fc.shape[1]
    L = len(layer_slices)
    Bp = _ceil_to(B, _SUBLANES)   # pad batch to a full sublane tile

    # batch_first (B,T,D) -> time-major, zero-padded to (T, Bp, Dp) so every
    # per-step access in the kernel is a full aligned (8,128) tile; flattened
    # to (T*Bp, Dp) for the single batched layer-0 projection.  bf16 operands
    # for the MXU (accumulation stays f32 in-kernel).
    x_tbd = jnp.transpose(x_btd, (1, 0, 2)).astype(jnp.float32)
    x_pad = jnp.pad(x_tbd, ((0, 0), (0, Bp - B), (0, d_in_pad - D)))
    x_flat = x_pad.reshape(T * Bp, d_in_pad).astype(jnp.bfloat16)

    def vmem_spec():
        return pl.BlockSpec(memory_space=pltpu.MemorySpace.VMEM)

    out = pl.pallas_call(
        _make_wavefront_lstm_fc_kernel(T, Bp, H, L, layer_slices),
        out_shape=jax.ShapeDtypeStruct((Bp, O), jnp.float32),
        in_specs=[vmem_spec() for _ in range(5)],
        out_specs=vmem_spec(),
        scratch_shapes=[
            pltpu.VMEM((T * Bp, 4 * H), jnp.float32),  # layer-0 input projections
        ],
        compiler_params=pltpu.CompilerParams(
            # Tiny footprint here; explicit budget so scaled configs fail
            # loudly instead of silently spilling.  For H >~ 1k on v7x stream
            # per-layer weight slabs with a grid axis instead of keeping all
            # weights resident.
            vmem_limit_bytes=32 * 1024 * 1024),
    )(x_flat, w_slab, b_all, w_fc, b_fc)
    return out[:B]


# ---------------------------------- Model --------------------------------------
class LSTMModelPallas:
    """JAX/Pallas port of the PyTorch LSTMModel (LSTM batch_first + Linear)."""

    def __init__(self, input_size, hidden_size, num_layers, output_size, key):
        self.input_size = input_size
        self.hidden_size = hidden_size
        self.num_layers = num_layers
        self.output_size = output_size

        k = 1.0 / jnp.sqrt(jnp.float32(hidden_size))
        self.layers = []
        for layer in range(num_layers):
            d_in = input_size if layer == 0 else hidden_size
            key, k1, k2, k3, k4 = jax.random.split(key, 5)
            # stored transposed relative to PyTorch: (D, 4H) / (H, 4H),
            # gate order i|f|g|o, b = b_ih + b_hh.
            w_ih = jax.random.uniform(k1, (d_in, 4 * hidden_size),
                                      jnp.float32, -k, k)
            w_hh = jax.random.uniform(k2, (hidden_size, 4 * hidden_size),
                                      jnp.float32, -k, k)
            b_ih = jax.random.uniform(k3, (4 * hidden_size,), jnp.float32, -k, k)
            b_hh = jax.random.uniform(k4, (4 * hidden_size,), jnp.float32, -k, k)
            self.layers.append((w_ih, w_hh, (b_ih + b_hh).reshape(1, -1)))

        key, k5, k6 = jax.random.split(key, 3)
        self.w_fc = jax.random.uniform(k5, (hidden_size, output_size),
                                       jnp.float32, -k, k)
        self.b_fc = jax.random.uniform(k6, (1, output_size),
                                       jnp.float32, -k, k)

        # Kernel-side packed params (gate-permuted, bf16 slab), built once.
        self._kparams = _prepare_kernel_params(self.layers, self.w_fc, self.b_fc)

    def __call__(self, x_btd):
        return fused_lstm_fc(x_btd, self._kparams, self.hidden_size)


# --------------------------- pure-JAX reference --------------------------------
def _reference_forward(model, x_btd):
    """f32 reference in PyTorch gate order / layout."""
    h = jnp.transpose(x_btd, (1, 0, 2)).astype(jnp.float32)   # (T, B, D)
    B = x_btd.shape[0]
    H = model.hidden_size
    for (w_ih, w_hh, b) in model.layers:
        def step(carry, x_t):
            hs, cs = carry
            g = x_t @ w_ih + hs @ w_hh + b
            i = jax.nn.sigmoid(g[:, 0 * H:1 * H])
            f = jax.nn.sigmoid(g[:, 1 * H:2 * H])
            gg = jnp.tanh(g[:, 2 * H:3 * H])
            o = jax.nn.sigmoid(g[:, 3 * H:4 * H])
            cs = f * cs + i * gg
            hs = o * jnp.tanh(cs)
            return (hs, cs), hs
        init = (jnp.zeros((B, H), jnp.float32), jnp.zeros((B, H), jnp.float32))
        _, h = jax.lax.scan(step, init, h)
    return h[-1] @ model.w_fc + model.b_fc


if __name__ == "__main__":
    key = jax.random.PRNGKey(0)
    k_x, k_p = jax.random.split(key)

    batch, seq, input_size = 2, 8, 8
    hidden_size, num_layers, output_size = 32, 2, 4

    x = jax.random.normal(k_x, (batch, seq, input_size), jnp.float32)

    model = LSTMModelPallas(input_size, hidden_size, num_layers, output_size, k_p)

    out = jax.block_until_ready(model(x))
    assert out.shape == (batch, output_size), out.shape

    ref = jax.block_until_ready(_reference_forward(model, x))
    # bf16 matmul operands (f32 accumulation) -> loosened tolerance vs f32 ref.
    assert jnp.allclose(out, ref, rtol=2e-2, atol=2e-2), \
        float(jnp.max(jnp.abs(out - ref)))

    print("KERNEL_OK")
</pallas_src>

<mosaic_0001>
module attributes {stable_mosaic.version = 11 : i64} {
  func.func @kernel(%arg0: memref<64x16xbf16, #tpu.memory_space<vmem>>, %arg1: memref<112x128xbf16, #tpu.memory_space<vmem>>, %arg2: memref<2x128xf32, #tpu.memory_space<vmem>>, %arg3: memref<32x4xf32, #tpu.memory_space<vmem>>, %arg4: memref<1x4xf32, #tpu.memory_space<vmem>>, %arg5: memref<8x4xf32, #tpu.memory_space<vmem>>, %arg6: memref<64x128xf32, #tpu.memory_space<vmem>>) attributes {dimension_semantics = [], scalar_prefetch = 0 : i64, scratch_operands = 1 : i64, tpu.core_type = #tpu.core_type<tc>} {
    %c0 = arith.constant 0 : index
    %c0_0 = arith.constant 0 : index
    %0 = vector.load %arg1[%c0, %c0_0] : memref<112x128xbf16, #tpu.memory_space<vmem>>, vector<16x128xbf16>
    %c16 = arith.constant 16 : index
    %c0_1 = arith.constant 0 : index
    %1 = vector.load %arg1[%c16, %c0_1] : memref<112x128xbf16, #tpu.memory_space<vmem>>, vector<32x128xbf16>
    %c48 = arith.constant 48 : index
    %c0_2 = arith.constant 0 : index
    %2 = vector.load %arg1[%c48, %c0_2] : memref<112x128xbf16, #tpu.memory_space<vmem>>, vector<32x128xbf16>
    %c80 = arith.constant 80 : index
    %c0_3 = arith.constant 0 : index
    %3 = vector.load %arg1[%c80, %c0_3] : memref<112x128xbf16, #tpu.memory_space<vmem>>, vector<32x128xbf16>
    %c1 = arith.constant 1 : index
    %c0_4 = arith.constant 0 : index
    %4 = vector.load %arg2[%c1, %c0_4] : memref<2x128xf32, #tpu.memory_space<vmem>>, vector<1x128xf32>
    %5 = vector.shape_cast %4 : vector<1x128xf32> to vector<1x128xf32>
    %6 = vector.broadcast %5 : vector<1x128xf32> to vector<8x128xf32>
    %c0_5 = arith.constant 0 : index
    %c0_6 = arith.constant 0 : index
    %7 = vector.load %arg0[%c0_5, %c0_6] : memref<64x16xbf16, #tpu.memory_space<vmem>>, vector<64x16xbf16>
    %cst = arith.constant dense<0.000000e+00> : vector<64x128xf32>
    %8 = tpu.matmul %7, %0, %cst {dimension_numbers = #tpu.dot_dimension_numbers<[1], [0], [0], [1], [0, 0, 1, 1], [], []>} : vector<64x16xbf16>, vector<16x128xbf16>, vector<64x128xf32> -> vector<64x128xf32>
    %c0_7 = arith.constant 0 : index
    %c0_8 = arith.constant 0 : index
    %9 = vector.load %arg2[%c0_7, %c0_8] : memref<2x128xf32, #tpu.memory_space<vmem>>, vector<1x128xf32>
    %10 = vector.broadcast %9 : vector<1x128xf32> to vector<64x128xf32>
    %11 = arith.addf %8, %10 : vector<64x128xf32>
    %c0_9 = arith.constant 0 : index
    %c0_10 = arith.constant 0 : index
    %12 = vector.load %arg6[%c0_9, %c0_10] : memref<64x128xf32, #tpu.memory_space<vmem>>, vector<64x128xf32>
    tpu.vector_store %arg6[%c0_9, %c0_10], %11 {strides = array<i32>} : memref<64x128xf32, #tpu.memory_space<vmem>>, vector<64x128xf32>,
    %cst_11 = arith.constant 0.000000e+00 : f32
    %13 = vector.broadcast %cst_11 : f32 to vector<8x32xf32>
    %cst_12 = arith.constant 0.000000e+00 : f32
    %14 = vector.broadcast %cst_12 : f32 to vector<8x32xf32>
    %cst_13 = arith.constant 0.000000e+00 : f32
    %15 = vector.broadcast %cst_13 : f32 to vector<8x32xf32>
    %cst_14 = arith.constant 0.000000e+00 : f32
    %16 = vector.broadcast %cst_14 : f32 to vector<8x32xf32>
    %c0_15 = arith.constant 0 : index
    %c0_16 = arith.constant 0 : index
    %17 = vector.load %arg6[%c0_15, %c0_16] : memref<64x128xf32, #tpu.memory_space<vmem>>, vector<8x128xf32>
    %18 = arith.truncf %13 : vector<8x32xf32> to vector<8x32xbf16>
    %cst_17 = arith.constant dense<0.000000e+00> : vector<8x128xf32>
    %19 = tpu.matmul %18, %1, %cst_17 {dimension_numbers = #tpu.dot_dimension_numbers<[1], [0], [0], [1], [0, 0, 1, 1], [], []>} : vector<8x32xbf16>, vector<32x128xbf16>, vector<8x128xf32> -> vector<8x128xf32>
    %20 = arith.addf %17, %19 : vector<8x128xf32>
    %21 = vector.extract_strided_slice %20 {offsets = [0, 0], sizes = [8, 96], strides = [1, 1]} : vector<8x128xf32> to vector<8x96xf32>
    %22 = arith.negf %21 : vector<8x96xf32>
    %23 = math.exp %22 : vector<8x96xf32>
    %cst_18 = arith.constant 1.000000e+00 : f32
    %24 = vector.broadcast %cst_18 : f32 to vector<8x96xf32>
    %25 = arith.addf %24, %23 : vector<8x96xf32>
    %26 = arith.divf %24, %25 : vector<8x96xf32>
    %27 = vector.extract_strided_slice %20 {offsets = [0, 96], sizes = [8, 32], strides = [1, 1]} : vector<8x128xf32> to vector<8x32xf32>
    %28 = math.tanh %27 : vector<8x32xf32>
    %29 = vector.extract_strided_slice %26 {offsets = [0, 0], sizes = [8, 32], strides = [1, 1]} : vector<8x96xf32> to vector<8x32xf32>
    %30 = vector.extract_strided_slice %26 {offsets = [0, 32], sizes = [8, 32], strides = [1, 1]} : vector<8x96xf32> to vector<8x32xf32>
    %31 = vector.extract_strided_slice %26 {offsets = [0, 64], sizes = [8, 32], strides = [1, 1]} : vector<8x96xf32> to vector<8x32xf32>
    %32 = arith.mulf %30, %15 : vector<8x32xf32>
    %33 = arith.mulf %29, %28 : vector<8x32xf32>
    %34 = arith.addf %32, %33 : vector<8x32xf32>
    %35 = math.tanh %34 : vector<8x32xf32>
    %36 = arith.mulf %31, %35 : vector<8x32xf32>
    %37 = arith.truncf %36 : vector<8x32xf32> to vector<8x32xbf16>
    %cst_19 = arith.constant dense<0.000000e+00> : vector<8x128xf32>
    %38 = tpu.matmul %37, %2, %cst_19 {dimension_numbers = #tpu.dot_dimension_numbers<[1], [0], [0], [1], [0, 0, 1, 1], [], []>} : vector<8x32xbf16>, vector<32x128xbf16>, vector<8x128xf32> -> vector<8x128xf32>
    %39 = arith.truncf %14 : vector<8x32xf32> to vector<8x32xbf16>
    %cst_20 = arith.constant dense<0.000000e+00> : vector<8x128xf32>
    %40 = tpu.matmul %39, %3, %cst_20 {dimension_numbers = #tpu.dot_dimension_numbers<[1], [0], [0], [1], [0, 0, 1, 1], [], []>} : vector<8x32xbf16>, vector<32x128xbf16>, vector<8x128xf32> -> vector<8x128xf32>
    %41 = arith.addf %38, %40 : vector<8x128xf32>
    %42 = arith.addf %41, %6 : vector<8x128xf32>
    %43 = vector.extract_strided_slice %42 {offsets = [0, 0], sizes = [8, 96], strides = [1, 1]} : vector<8x128xf32> to vector<8x96xf32>
    %44 = arith.negf %43 : vector<8x96xf32>
    %45 = math.exp %44 : vector<8x96xf32>
    %cst_21 = arith.constant 1.000000e+00 : f32
    %46 = vector.broadcast %cst_21 : f32 to vector<8x96xf32>
    %47 = arith.addf %46, %45 : vector<8x96xf32>
    %48 = arith.divf %46, %47 : vector<8x96xf32>
    %49 = vector.extract_strided_slice %42 {offsets = [0, 96], sizes = [8, 32], strides = [1, 1]} : vector<8x128xf32> to vector<8x32xf32>
    %50 = math.tanh %49 : vector<8x32xf32>
    %51 = vector.extract_strided_slice %48 {offsets = [0, 0], sizes = [8, 32], strides = [1, 1]} : vector<8x96xf32> to vector<8x32xf32>
    %52 = vector.extract_strided_slice %48 {offsets = [0, 32], sizes = [8, 32], strides = [1, 1]} : vector<8x96xf32> to vector<8x32xf32>
    %53 = vector.extract_strided_slice %48 {offsets = [0, 64], sizes = [8, 32], strides = [1, 1]} : vector<8x96xf32> to vector<8x32xf32>
    %54 = arith.mulf %52, %16 : vector<8x32xf32>
    %55 = arith.mulf %51, %50 : vector<8x32xf32>
    %56 = arith.addf %54, %55 : vector<8x32xf32>
    %57 = math.tanh %56 : vector<8x32xf32>
    %58 = arith.mulf %53, %57 : vector<8x32xf32>
    %c8 = arith.constant 8 : index
    %c0_22 = arith.constant 0 : index
    %59 = vector.load %arg6[%c8, %c0_22] : memref<64x128xf32, #tpu.memory_space<vmem>>, vector<8x128xf32>
    %60 = arith.truncf %36 : vector<8x32xf32> to vector<8x32xbf16>
    %cst_23 = arith.constant dense<0.000000e+00> : vector<8x128xf32>
    %61 = tpu.matmul %60, %1, %cst_23 {dimension_numbers = #tpu.dot_dimension_numbers<[1], [0], [0], [1], [0, 0, 1, 1], [], []>} : vector<8x32xbf16>, vector<32x128xbf16>, vector<8x128xf32> -> vector<8x128xf32>
    %62 = arith.addf %59, %61 : vector<8x128xf32>
    %63 = vector.extract_strided_slice %62 {offsets = [0, 0], sizes = [8, 96], strides = [1, 1]} : vector<8x128xf32> to vector<8x96xf32>
    %64 = arith.negf %63 : vector<8x96xf32>
    %65 = math.exp %64 : vector<8x96xf32>
    %cst_24 = arith.constant 1.000000e+00 : f32
    %66 = vector.broadcast %cst_24 : f32 to vector<8x96xf32>
    %67 = arith.addf %66, %65 : vector<8x96xf32>
    %68 = arith.divf %66, %67 : vector<8x96xf32>
    %69 = vector.extract_strided_slice %62 {offsets = [0, 96], sizes = [8, 32], strides = [1, 1]} : vector<8x128xf32> to vector<8x32xf32>
    %70 = math.tanh %69 : vector<8x32xf32>
    %71 = vector.extract_strided_slice %68 {offsets = [0, 0], sizes = [8, 32], strides = [1, 1]} : vector<8x96xf32> to vector<8x32xf32>
    %72 = vector.extract_strided_slice %68 {offsets = [0, 32], sizes = [8, 32], strides = [1, 1]} : vector<8x96xf32> to vector<8x32xf32>
    %73 = vector.extract_strided_slice %68 {offsets = [0, 64], sizes = [8, 32], strides = [1, 1]} : vector<8x96xf32> to vector<8x32xf32>
    %74 = arith.mulf %72, %34 : vector<8x32xf32>
    %75 = arith.mulf %71, %70 : vector<8x32xf32>
    %76 = arith.addf %74, %75 : vector<8x32xf32>
    %77 = math.tanh %76 : vector<8x32xf32>
    %78 = arith.mulf %73, %77 : vector<8x32xf32>
    %79 = arith.truncf %78 : vector<8x32xf32> to vector<8x32xbf16>
    %cst_25 = arith.constant dense<0.000000e+00> : vector<8x128xf32>
    %80 = tpu.matmul %79, %2, %cst_25 {dimension_numbers = #tpu.dot_dimension_numbers<[1], [0], [0], [1], [0, 0, 1, 1], [], []>} : vector<8x32xbf16>, vector<32x128xbf16>, vector<8x128xf32> -> vector<8x128xf32>
    %81 = arith.truncf %58 : vector<8x32xf32> to vector<8x32xbf16>
    %cst_26 = arith.constant dense<0.000000e+00> : vector<8x128xf32>
    %82 = tpu.matmul %81, %3, %cst_26 {dimension_numbers = #tpu.dot_dimension_numbers<[1], [0], [0], [1], [0, 0, 1, 1], [], []>} : vector<8x32xbf16>, vector<32x128xbf16>, vector<8x128xf32> -> vector<8x128xf32>
    %83 = arith.addf %80, %82 : vector<8x128xf32>
    %84 = arith.addf %83, %6 : vector<8x128xf32>
    %85 = vector.extract_strided_slice %84 {offsets = [0, 0], sizes = [8, 96], strides = [1, 1]} : vector<8x128xf32> to vector<8x96xf32>
    %86 = arith.negf %85 : vector<8x96xf32>
    %87 = math.exp %86 : vector<8x96xf32>
    %cst_27 = arith.constant 1.000000e+00 : f32
    %88 = vector.broadcast %cst_27 : f32 to vector<8x96xf32>
    %89 = arith.addf %88, %87 : vector<8x96xf32>
    %90 = arith.divf %88, %89 : vector<8x96xf32>
    %91 = vector.extract_strided_slice %84 {offsets = [0, 96], sizes = [8, 32], strides = [1, 1]} : vector<8x128xf32> to vector<8x32xf32>
    %92 = math.tanh %91 : vector<8x32xf32>
    %93 = vector.extract_strided_slice %90 {offsets = [0, 0], sizes = [8, 32], strides = [1, 1]} : vector<8x96xf32> to vector<8x32xf32>
    %94 = vector.extract_strided_slice %90 {offsets = [0, 32], sizes = [8, 32], strides = [1, 1]} : vector<8x96xf32> to vector<8x32xf32>
    %95 = vector.extract_strided_slice %90 {offsets = [0, 64], sizes = [8, 32], strides = [1, 1]} : vector<8x96xf32> to vector<8x32xf32>
    %96 = arith.mulf %94, %56 : vector<8x32xf32>
    %97 = arith.mulf %93, %92 : vector<8x32xf32>
    %98 = arith.addf %96, %97 : vector<8x32xf32>
    %99 = math.tanh %98 : vector<8x32xf32>
    %100 = arith.mulf %95, %99 : vector<8x32xf32>
    %c16_28 = arith.constant 16 : index
    %c0_29 = arith.constant 0 : index
    %101 = vector.load %arg6[%c16_28, %c0_29] : memref<64x128xf32, #tpu.memory_space<vmem>>, vector<8x128xf32>
    %102 = arith.truncf %78 : vector<8x32xf32> to vector<8x32xbf16>
    %cst_30 = arith.constant dense<0.000000e+00> : vector<8x128xf32>
    %103 = tpu.matmul %102, %1, %cst_30 {dimension_numbers = #tpu.dot_dimension_numbers<[1], [0], [0], [1], [0, 0, 1, 1], [], []>} : vector<8x32xbf16>, vector<32x128xbf16>, vector<8x128xf32> -> vector<8x128xf32>
    %104 = arith.addf %101, %103 : vector<8x128xf32>
    %105 = vector.extract_strided_slice %104 {offsets = [0, 0], sizes = [8, 96], strides = [1, 1]} : vector<8x128xf32> to vector<8x96xf32>
    %106 = arith.negf %105 : vector<8x96xf32>
    %107 = math.exp %106 : vector<8x96xf32>
    %cst_31 = arith.constant 1.000000e+00 : f32
    %108 = vector.broadcast %cst_31 : f32 to vector<8x96xf32>
    %109 = arith.addf %108, %107 : vector<8x96xf32>
    %110 = arith.divf %108, %109 : vector<8x96xf32>
    %111 = vector.extract_strided_slice %104 {offsets = [0, 96], sizes = [8, 32], strides = [1, 1]} : vector<8x128xf32> to vector<8x32xf32>
    %112 = math.tanh %111 : vector<8x32xf32>
    %113 = vector.extract_strided_slice %110 {offsets = [0, 0], sizes = [8, 32], strides = [1, 1]} : vector<8x96xf32> to vector<8x32xf32>
    %114 = vector.extract_strided_slice %110 {offsets = [0, 32], sizes = [8, 32], strides = [1, 1]} : vector<8x96xf32> to vector<8x32xf32>
    %115 = vector.extract_strided_slice %110 {offsets = [0, 64], sizes = [8, 32], strides = [1, 1]} : vector<8x96xf32> to vector<8x32xf32>
    %116 = arith.mulf %114, %76 : vector<8x32xf32>
    %117 = arith.mulf %113, %112 : vector<8x32xf32>
    %118 = arith.addf %116, %117 : vector<8x32xf32>
    %119 = math.tanh %118 : vector<8x32xf32>
    %120 = arith.mulf %115, %119 : vector<8x32xf32>
    %121 = arith.truncf %120 : vector<8x32xf32> to vector<8x32xbf16>
    %cst_32 = arith.constant dense<0.000000e+00> : vector<8x128xf32>
    %122 = tpu.matmul %121, %2, %cst_32 {dimension_numbers = #tpu.dot_dimension_numbers<[1], [0], [0], [1], [0, 0, 1, 1], [], []>} : vector<8x32xbf16>, vector<32x128xbf16>, vector<8x128xf32> -> vector<8x128xf32>
    %123 = arith.truncf %100 : vector<8x32xf32> to vector<8x32xbf16>
    %cst_33 = arith.constant dense<0.000000e+00> : vector<8x128xf32>
    %124 = tpu.matmul %123, %3, %cst_33 {dimension_numbers = #tpu.dot_dimension_numbers<[1], [0], [0], [1], [0, 0, 1, 1], [], []>} : vector<8x32xbf16>, vector<32x128xbf16>, vector<8x128xf32> -> vector<8x128xf32>
    %125 = arith.addf %122, %124 : vector<8x128xf32>
    %126 = arith.addf %125, %6 : vector<8x128xf32>
    %127 = vector.extract_strided_slice %126 {offsets = [0, 0], sizes = [8, 96], strides = [1, 1]} : vector<8x128xf32> to vector<8x96xf32>
    %128 = arith.negf %127 : vector<8x96xf32>
    %129 = math.exp %128 : vector<8x96xf32>
    %cst_34 = arith.constant 1.000000e+00 : f32
    %130 = vector.broadcast %cst_34 : f32 to vector<8x96xf32>
    %131 = arith.addf %130, %129 : vector<8x96xf32>
    %132 = arith.divf %130, %131 : vector<8x96xf32>
    %133 = vector.extract_strided_slice %126 {offsets = [0, 96], sizes = [8, 32], strides = [1, 1]} : vector<8x128xf32> to vector<8x32xf32>
    %134 = math.tanh %133 : vector<8x32xf32>
    %135 = vector.extract_strided_slice %132 {offsets = [0, 0], sizes = [8, 32], strides = [1, 1]} : vector<8x96xf32> to vector<8x32xf32>
    %136 = vector.extract_strided_slice %132 {offsets = [0, 32], sizes = [8, 32], strides = [1, 1]} : vector<8x96xf32> to vector<8x32xf32>
    %137 = vector.extract_strided_slice %132 {offsets = [0, 64], sizes = [8, 32], strides = [1, 1]} : vector<8x96xf32> to vector<8x32xf32>
    %138 = arith.mulf %136, %98 : vector<8x32xf32>
    %139 = arith.mulf %135, %134 : vector<8x32xf32>
    %140 = arith.addf %138, %139 : vector<8x32xf32>
    %141 = math.tanh %140 : vector<8x32xf32>
    %142 = arith.mulf %137, %141 : vector<8x32xf32>
    %c24 = arith.constant 24 : index
    %c0_35 = arith.constant 0 : index
    %143 = vector.load %arg6[%c24, %c0_35] : memref<64x128xf32, #tpu.memory_space<vmem>>, vector<8x128xf32>
    %144 = arith.truncf %120 : vector<8x32xf32> to vector<8x32xbf16>
    %cst_36 = arith.constant dense<0.000000e+00> : vector<8x128xf32>
    %145 = tpu.matmul %144, %1, %cst_36 {dimension_numbers = #tpu.dot_dimension_numbers<[1], [0], [0], [1], [0, 0, 1, 1], [], []>} : vector<8x32xbf16>, vector<32x128xbf16>, vector<8x128xf32> -> vector<8x128xf32>
    %146 = arith.addf %143, %145 : vector<8x128xf32>
    %147 = vector.extract_strided_slice %146 {offsets = [0, 0], sizes = [8, 96], strides = [1, 1]} : vector<8x128xf32> to vector<8x96xf32>
    %148 = arith.negf %147 : vector<8x96xf32>
    %149 = math.exp %148 : vector<8x96xf32>
    %cst_37 = arith.constant 1.000000e+00 : f32
    %150 = vector.broadcast %cst_37 : f32 to vector<8x96xf32>
    %151 = arith.addf %150, %149 : vector<8x96xf32>
    %152 = arith.divf %150, %151 : vector<8x96xf32>
    %153 = vector.extract_strided_slice %146 {offsets = [0, 96], sizes = [8, 32], strides = [1, 1]} : vector<8x128xf32> to vector<8x32xf32>
    %154 = math.tanh %153 : vector<8x32xf32>
    %155 = vector.extract_strided_slice %152 {offsets = [0, 0], sizes = [8, 32], strides = [1, 1]} : vector<8x96xf32> to vector<8x32xf32>
    %156 = vector.extract_strided_slice %152 {offsets = [0, 32], sizes = [8, 32], strides = [1, 1]} : vector<8x96xf32> to vector<8x32xf32>
    %157 = vector.extract_strided_slice %152 {offsets = [0, 64], sizes = [8, 32], strides = [1, 1]} : vector<8x96xf32> to vector<8x32xf32>
    %158 = arith.mulf %156, %118 : vector<8x32xf32>
    %159 = arith.mulf %155, %154 : vector<8x32xf32>
    %160 = arith.addf %158, %159 : vector<8x32xf32>
    %161 = math.tanh %160 : vector<8x32xf32>
    %162 = arith.mulf %157, %161 : vector<8x32xf32>
    %163 = arith.truncf %162 : vector<8x32xf32> to vector<8x32xbf16>
    %cst_38 = arith.constant dense<0.000000e+00> : vector<8x128xf32>
    %164 = tpu.matmul %163, %2, %cst_38 {dimension_numbers = #tpu.dot_dimension_numbers<[1], [0], [0], [1], [0, 0, 1, 1], [], []>} : vector<8x32xbf16>, vector<32x128xbf16>, vector<8x128xf32> -> vector<8x128xf32>
    %165 = arith.truncf %142 : vector<8x32xf32> to vector<8x32xbf16>
    %cst_39 = arith.constant dense<0.000000e+00> : vector<8x128xf32>
    %166 = tpu.matmul %165, %3, %cst_39 {dimension_numbers = #tpu.dot_dimension_numbers<[1], [0], [0], [1], [0, 0, 1, 1], [], []>} : vector<8x32xbf16>, vector<32x128xbf16>, vector<8x128xf32> -> vector<8x128xf32>
    %167 = arith.addf %164, %166 : vector<8x128xf32>
    %168 = arith.addf %167, %6 : vector<8x128xf32>
    %169 = vector.extract_strided_slice %168 {offsets = [0, 0], sizes = [8, 96], strides = [1, 1]} : vector<8x128xf32> to vector<8x96xf32>
    %170 = arith.negf %169 : vector<8x96xf32>
    %171 = math.exp %170 : vector<8x96xf32>
    %cst_40 = arith.constant 1.000000e+00 : f32
    %172 = vector.broadcast %cst_40 : f32 to vector<8x96xf32>
    %173 = arith.addf %172, %171 : vector<8x96xf32>
    %174 = arith.divf %172, %173 : vector<8x96xf32>
    %175 = vector.extract_strided_slice %168 {offsets = [0, 96], sizes = [8, 32], strides = [1, 1]} : vector<8x128xf32> to vector<8x32xf32>
    %176 = math.tanh %175 : vector<8x32xf32>
    %177 = vector.extract_strided_slice %174 {offsets = [0, 0], sizes = [8, 32], strides = [1, 1]} : vector<8x96xf32> to vector<8x32xf32>
    %178 = vector.extract_strided_slice %174 {offsets = [0, 32], sizes = [8, 32], strides = [1, 1]} : vector<8x96xf32> to vector<8x32xf32>
    %179 = vector.extract_strided_slice %174 {offsets = [0, 64], sizes = [8, 32], strides = [1, 1]} : vector<8x96xf32> to vector<8x32xf32>
    %180 = arith.mulf %178, %140 : vector<8x32xf32>
    %181 = arith.mulf %177, %176 : vector<8x32xf32>
    %182 = arith.addf %180, %181 : vector<8x32xf32>
    %183 = math.tanh %182 : vector<8x32xf32>
    %184 = arith.mulf %179, %183 : vector<8x32xf32>
    %c32 = arith.constant 32 : index
    %c0_41 = arith.constant 0 : index
    %185 = vector.load %arg6[%c32, %c0_41] : memref<64x128xf32, #tpu.memory_space<vmem>>, vector<8x128xf32>
    %186 = arith.truncf %162 : vector<8x32xf32> to vector<8x32xbf16>
    %cst_42 = arith.constant dense<0.000000e+00> : vector<8x128xf32>
    %187 = tpu.matmul %186, %1, %cst_42 {dimension_numbers = #tpu.dot_dimension_numbers<[1], [0], [0], [1], [0, 0, 1, 1], [], []>} : vector<8x32xbf16>, vector<32x128xbf16>, vector<8x128xf32> -> vector<8x128xf32>
    %188 = arith.addf %185, %187 : vector<8x128xf32>
    %189 = vector.extract_strided_slice %188 {offsets = [0, 0], sizes = [8, 96], strides = [1, 1]} : vector<8x128xf32> to vector<8x96xf32>
    %190 = arith.negf %189 : vector<8x96xf32>
    %191 = math.exp %190 : vector<8x96xf32>
    %cst_43 = arith.constant 1.000000e+00 : f32
    %192 = vector.broadcast %cst_43 : f32 to vector<8x96xf32>
    %193 = arith.addf %192, %191 : vector<8x96xf32>
    %194 = arith.divf %192, %193 : vector<8x96xf32>
    %195 = vector.extract_strided_slice %188 {offsets = [0, 96], sizes = [8, 32], strides = [1, 1]} : vector<8x128xf32> to vector<8x32xf32>
    %196 = math.tanh %195 : vector<8x32xf32>
    %197 = vector.extract_strided_slice %194 {offsets = [0, 0], sizes = [8, 32], strides = [1, 1]} : vector<8x96xf32> to vector<8x32xf32>
    %198 = vector.extract_strided_slice %194 {offsets = [0, 32], sizes = [8, 32], strides = [1, 1]} : vector<8x96xf32> to vector<8x32xf32>
    %199 = vector.extract_strided_slice %194 {offsets = [0, 64], sizes = [8, 32], strides = [1, 1]} : vector<8x96xf32> to vector<8x32xf32>
    %200 = arith.mulf %198, %160 : vector<8x32xf32>
    %201 = arith.mulf %197, %196 : vector<8x32xf32>
    %202 = arith.addf %200, %201 : vector<8x32xf32>
    %203 = math.tanh %202 : vector<8x32xf32>
    %204 = arith.mulf %199, %203 : vector<8x32xf32>
    %205 = arith.truncf %204 : vector<8x32xf32> to vector<8x32xbf16>
    %cst_44 = arith.constant dense<0.000000e+00> : vector<8x128xf32>
    %206 = tpu.matmul %205, %2, %cst_44 {dimension_numbers = #tpu.dot_dimension_numbers<[1], [0], [0], [1], [0, 0, 1, 1], [], []>} : vector<8x32xbf16>, vector<32x128xbf16>, vector<8x128xf32> -> vector<8x128xf32>
    %207 = arith.truncf %184 : vector<8x32xf32> to vector<8x32xbf16>
    %cst_45 = arith.constant dense<0.000000e+00> : vector<8x128xf32>
    %208 = tpu.matmul %207, %3, %cst_45 {dimension_numbers = #tpu.dot_dimension_numbers<[1], [0], [0], [1], [0, 0, 1, 1], [], []>} : vector<8x32xbf16>, vector<32x128xbf16>, vector<8x128xf32> -> vector<8x128xf32>
    %209 = arith.addf %206, %208 : vector<8x128xf32>
    %210 = arith.addf %209, %6 : vector<8x128xf32>
    %211 = vector.extract_strided_slice %210 {offsets = [0, 0], sizes = [8, 96], strides = [1, 1]} : vector<8x128xf32> to vector<8x96xf32>
    %212 = arith.negf %211 : vector<8x96xf32>
    %213 = math.exp %212 : vector<8x96xf32>
    %cst_46 = arith.constant 1.000000e+00 : f32
    %214 = vector.broadcast %cst_46 : f32 to vector<8x96xf32>
    %215 = arith.addf %214, %213 : vector<8x96xf32>
    %216 = arith.divf %214, %215 : vector<8x96xf32>
    %217 = vector.extract_strided_slice %210 {offsets = [0, 96], sizes = [8, 32], strides = [1, 1]} : vector<8x128xf32> to vector<8x32xf32>
    %218 = math.tanh %217 : vector<8x32xf32>
    %219 = vector.extract_strided_slice %216 {offsets = [0, 0], sizes = [8, 32], strides = [1, 1]} : vector<8x96xf32> to vector<8x32xf32>
    %220 = vector.extract_strided_slice %216 {offsets = [0, 32], sizes = [8, 32], strides = [1, 1]} : vector<8x96xf32> to vector<8x32xf32>
    %221 = vector.extract_strided_slice %216 {offsets = [0, 64], sizes = [8, 32], strides = [1, 1]} : vector<8x96xf32> to vector<8x32xf32>
    %222 = arith.mulf %220, %182 : vector<8x32xf32>
    %223 = arith.mulf %219, %218 : vector<8x32xf32>
    %224 = arith.addf %222, %223 : vector<8x32xf32>
    %225 = math.tanh %224 : vector<8x32xf32>
    %226 = arith.mulf %221, %225 : vector<8x32xf32>
    %c40 = arith.constant 40 : index
    %c0_47 = arith.constant 0 : index
    %227 = vector.load %arg6[%c40, %c0_47] : memref<64x128xf32, #tpu.memory_space<vmem>>, vector<8x128xf32>
    %228 = arith.truncf %204 : vector<8x32xf32> to vector<8x32xbf16>
    %cst_48 = arith.constant dense<0.000000e+00> : vector<8x128xf32>
    %229 = tpu.matmul %228, %1, %cst_48 {dimension_numbers = #tpu.dot_dimension_numbers<[1], [0], [0], [1], [0, 0, 1, 1], [], []>} : vector<8x32xbf16>, vector<32x128xbf16>, vector<8x128xf32> -> vector<8x128xf32>
    %230 = arith.addf %227, %229 : vector<8x128xf32>
    %231 = vector.extract_strided_slice %230 {offsets = [0, 0], sizes = [8, 96], strides = [1, 1]} : vector<8x128xf32> to vector<8x96xf32>
    %232 = arith.negf %231 : vector<8x96xf32>
    %233 = math.exp %232 : vector<8x96xf32>
    %cst_49 = arith.constant 1.000000e+00 : f32
    %234 = vector.broadcast %cst_49 : f32 to vector<8x96xf32>
    %235 = arith.addf %234, %233 : vector<8x96xf32>
    %236 = arith.divf %234, %235 : vector<8x96xf32>
    %237 = vector.extract_strided_slice %230 {offsets = [0, 96], sizes = [8, 32], strides = [1, 1]} : vector<8x128xf32> to vector<8x32xf32>
    %238 = math.tanh %237 : vector<8x32xf32>
    %239 = vector.extract_strided_slice %236 {offsets = [0, 0], sizes = [8, 32], strides = [1, 1]} : vector<8x96xf32> to vector<8x32xf32>
    %240 = vector.extract_strided_slice %236 {offsets = [0, 32], sizes = [8, 32], strides = [1, 1]} : vector<8x96xf32> to vector<8x32xf32>
    %241 = vector.extract_strided_slice %236 {offsets = [0, 64], sizes = [8, 32], strides = [1, 1]} : vector<8x96xf32> to vector<8x32xf32>
    %242 = arith.mulf %240, %202 : vector<8x32xf32>
    %243 = arith.mulf %239, %238 : vector<8x32xf32>
    %244 = arith.addf %242, %243 : vector<8x32xf32>
    %245 = math.tanh %244 : vector<8x32xf32>
    %246 = arith.mulf %241, %245 : vector<8x32xf32>
    %247 = arith.truncf %246 : vector<8x32xf32> to vector<8x32xbf16>
    %cst_50 = arith.constant dense<0.000000e+00> : vector<8x128xf32>
    %248 = tpu.matmul %247, %2, %cst_50 {dimension_numbers = #tpu.dot_dimension_numbers<[1], [0], [0], [1], [0, 0, 1, 1], [], []>} : vector<8x32xbf16>, vector<32x128xbf16>, vector<8x128xf32> -> vector<8x128xf32>
    %249 = arith.truncf %226 : vector<8x32xf32> to vector<8x32xbf16>
    %cst_51 = arith.constant dense<0.000000e+00> : vector<8x128xf32>
    %250 = tpu.matmul %249, %3, %cst_51 {dimension_numbers = #tpu.dot_dimension_numbers<[1], [0], [0], [1], [0, 0, 1, 1], [], []>} : vector<8x32xbf16>, vector<32x128xbf16>, vector<8x128xf32> -> vector<8x128xf32>
    %251 = arith.addf %248, %250 : vector<8x128xf32>
    %252 = arith.addf %251, %6 : vector<8x128xf32>
    %253 = vector.extract_strided_slice %252 {offsets = [0, 0], sizes = [8, 96], strides = [1, 1]} : vector<8x128xf32> to vector<8x96xf32>
    %254 = arith.negf %253 : vector<8x96xf32>
    %255 = math.exp %254 : vector<8x96xf32>
    %cst_52 = arith.constant 1.000000e+00 : f32
    %256 = vector.broadcast %cst_52 : f32 to vector<8x96xf32>
    %257 = arith.addf %256, %255 : vector<8x96xf32>
    %258 = arith.divf %256, %257 : vector<8x96xf32>
    %259 = vector.extract_strided_slice %252 {offsets = [0, 96], sizes = [8, 32], strides = [1, 1]} : vector<8x128xf32> to vector<8x32xf32>
    %260 = math.tanh %259 : vector<8x32xf32>
    %261 = vector.extract_strided_slice %258 {offsets = [0, 0], sizes = [8, 32], strides = [1, 1]} : vector<8x96xf32> to vector<8x32xf32>
    %262 = vector.extract_strided_slice %258 {offsets = [0, 32], sizes = [8, 32], strides = [1, 1]} : vector<8x96xf32> to vector<8x32xf32>
    %263 = vector.extract_strided_slice %258 {offsets = [0, 64], sizes = [8, 32], strides = [1, 1]} : vector<8x96xf32> to vector<8x32xf32>
    %264 = arith.mulf %262, %224 : vector<8x32xf32>
    %265 = arith.mulf %261, %260 : vector<8x32xf32>
    %266 = arith.addf %264, %265 : vector<8x32xf32>
    %267 = math.tanh %266 : vector<8x32xf32>
    %268 = arith.mulf %263, %267 : vector<8x32xf32>
    %c48_53 = arith.constant 48 : index
    %c0_54 = arith.constant 0 : index
    %269 = vector.load %arg6[%c48_53, %c0_54] : memref<64x128xf32, #tpu.memory_space<vmem>>, vector<8x128xf32>
    %270 = arith.truncf %246 : vector<8x32xf32> to vector<8x32xbf16>
    %cst_55 = arith.constant dense<0.000000e+00> : vector<8x128xf32>
    %271 = tpu.matmul %270, %1, %cst_55 {dimension_numbers = #tpu.dot_dimension_numbers<[1], [0], [0], [1], [0, 0, 1, 1], [], []>} : vector<8x32xbf16>, vector<32x128xbf16>, vector<8x128xf32> -> vector<8x128xf32>
    %272 = arith.addf %269, %271 : vector<8x128xf32>
    %273 = vector.extract_strided_slice %272 {offsets = [0, 0], sizes = [8, 96], strides = [1, 1]} : vector<8x128xf32> to vector<8x96xf32>
    %274 = arith.negf %273 : vector<8x96xf32>
    %275 = math.exp %274 : vector<8x96xf32>
    %cst_56 = arith.constant 1.000000e+00 : f32
    %276 = vector.broadcast %cst_56 : f32 to vector<8x96xf32>
    %277 = arith.addf %276, %275 : vector<8x96xf32>
    %278 = arith.divf %276, %277 : vector<8x96xf32>
    %279 = vector.extract_strided_slice %272 {offsets = [0, 96], sizes = [8, 32], strides = [1, 1]} : vector<8x128xf32> to vector<8x32xf32>
    %280 = math.tanh %279 : vector<8x32xf32>
    %281 = vector.extract_strided_slice %278 {offsets = [0, 0], sizes = [8, 32], strides = [1, 1]} : vector<8x96xf32> to vector<8x32xf32>
    %282 = vector.extract_strided_slice %278 {offsets = [0, 32], sizes = [8, 32], strides = [1, 1]} : vector<8x96xf32> to vector<8x32xf32>
    %283 = vector.extract_strided_slice %278 {offsets = [0, 64], sizes = [8, 32], strides = [1, 1]} : vector<8x96xf32> to vector<8x32xf32>
    %284 = arith.mulf %282, %244 : vector<8x32xf32>
    %285 = arith.mulf %281, %280 : vector<8x32xf32>
    %286 = arith.addf %284, %285 : vector<8x32xf32>
    %287 = math.tanh %286 : vector<8x32xf32>
    %288 = arith.mulf %283, %287 : vector<8x32xf32>
    %289 = arith.truncf %288 : vector<8x32xf32> to vector<8x32xbf16>
    %cst_57 = arith.constant dense<0.000000e+00> : vector<8x128xf32>
    %290 = tpu.matmul %289, %2, %cst_57 {dimension_numbers = #tpu.dot_dimension_numbers<[1], [0], [0], [1], [0, 0, 1, 1], [], []>} : vector<8x32xbf16>, vector<32x128xbf16>, vector<8x128xf32> -> vector<8x128xf32>
    %291 = arith.truncf %268 : vector<8x32xf32> to vector<8x32xbf16>
    %cst_58 = arith.constant dense<0.000000e+00> : vector<8x128xf32>
    %292 = tpu.matmul %291, %3, %cst_58 {dimension_numbers = #tpu.dot_dimension_numbers<[1], [0], [0], [1], [0, 0, 1, 1], [], []>} : vector<8x32xbf16>, vector<32x128xbf16>, vector<8x128xf32> -> vector<8x128xf32>
    %293 = arith.addf %290, %292 : vector<8x128xf32>
    %294 = arith.addf %293, %6 : vector<8x128xf32>
    %295 = vector.extract_strided_slice %294 {offsets = [0, 0], sizes = [8, 96], strides = [1, 1]} : vector<8x128xf32> to vector<8x96xf32>
    %296 = arith.negf %295 : vector<8x96xf32>
    %297 = math.exp %296 : vector<8x96xf32>
    %cst_59 = arith.constant 1.000000e+00 : f32
    %298 = vector.broadcast %cst_59 : f32 to vector<8x96xf32>
    %299 = arith.addf %298, %297 : vector<8x96xf32>
    %300 = arith.divf %298, %299 : vector<8x96xf32>
    %301 = vector.extract_strided_slice %294 {offsets = [0, 96], sizes = [8, 32], strides = [1, 1]} : vector<8x128xf32> to vector<8x32xf32>
    %302 = math.tanh %301 : vector<8x32xf32>
    %303 = vector.extract_strided_slice %300 {offsets = [0, 0], sizes = [8, 32], strides = [1, 1]} : vector<8x96xf32> to vector<8x32xf32>
    %304 = vector.extract_strided_slice %300 {offsets = [0, 32], sizes = [8, 32], strides = [1, 1]} : vector<8x96xf32> to vector<8x32xf32>
    %305 = vector.extract_strided_slice %300 {offsets = [0, 64], sizes = [8, 32], strides = [1, 1]} : vector<8x96xf32> to vector<8x32xf32>
    %306 = arith.mulf %304, %266 : vector<8x32xf32>
    %307 = arith.mulf %303, %302 : vector<8x32xf32>
    %308 = arith.addf %306, %307 : vector<8x32xf32>
    %309 = math.tanh %308 : vector<8x32xf32>
    %310 = arith.mulf %305, %309 : vector<8x32xf32>
    %c56 = arith.constant 56 : index
    %c0_60 = arith.constant 0 : index
    %311 = vector.load %arg6[%c56, %c0_60] : memref<64x128xf32, #tpu.memory_space<vmem>>, vector<8x128xf32>
    %312 = arith.truncf %288 : vector<8x32xf32> to vector<8x32xbf16>
    %cst_61 = arith.constant dense<0.000000e+00> : vector<8x128xf32>
    %313 = tpu.matmul %312, %1, %cst_61 {dimension_numbers = #tpu.dot_dimension_numbers<[1], [0], [0], [1], [0, 0, 1, 1], [], []>} : vector<8x32xbf16>, vector<32x128xbf16>, vector<8x128xf32> -> vector<8x128xf32>
    %314 = arith.addf %311, %313 : vector<8x128xf32>
    %315 = vector.extract_strided_slice %314 {offsets = [0, 0], sizes = [8, 96], strides = [1, 1]} : vector<8x128xf32> to vector<8x96xf32>
    %316 = arith.negf %315 : vector<8x96xf32>
    %317 = math.exp %316 : vector<8x96xf32>
    %cst_62 = arith.constant 1.000000e+00 : f32
    %318 = vector.broadcast %cst_62 : f32 to vector<8x96xf32>
    %319 = arith.addf %318, %317 : vector<8x96xf32>
    %320 = arith.divf %318, %319 : vector<8x96xf32>
    %321 = vector.extract_strided_slice %314 {offsets = [0, 96], sizes = [8, 32], strides = [1, 1]} : vector<8x128xf32> to vector<8x32xf32>
    %322 = math.tanh %321 : vector<8x32xf32>
    %323 = vector.extract_strided_slice %320 {offsets = [0, 0], sizes = [8, 32], strides = [1, 1]} : vector<8x96xf32> to vector<8x32xf32>
    %324 = vector.extract_strided_slice %320 {offsets = [0, 32], sizes = [8, 32], strides = [1, 1]} : vector<8x96xf32> to vector<8x32xf32>
    %325 = vector.extract_strided_slice %320 {offsets = [0, 64], sizes = [8, 32], strides = [1, 1]} : vector<8x96xf32> to vector<8x32xf32>
    %326 = arith.mulf %324, %286 : vector<8x32xf32>
    %327 = arith.mulf %323, %322 : vector<8x32xf32>
    %328 = arith.addf %326, %327 : vector<8x32xf32>
    %329 = math.tanh %328 : vector<8x32xf32>
    %330 = arith.mulf %325, %329 : vector<8x32xf32>
    %331 = arith.truncf %330 : vector<8x32xf32> to vector<8x32xbf16>
    %cst_63 = arith.constant dense<0.000000e+00> : vector<8x128xf32>
    %332 = tpu.matmul %331, %2, %cst_63 {dimension_numbers = #tpu.dot_dimension_numbers<[1], [0], [0], [1], [0, 0, 1, 1], [], []>} : vector<8x32xbf16>, vector<32x128xbf16>, vector<8x128xf32> -> vector<8x128xf32>
    %333 = arith.truncf %310 : vector<8x32xf32> to vector<8x32xbf16>
    %cst_64 = arith.constant dense<0.000000e+00> : vector<8x128xf32>
    %334 = tpu.matmul %333, %3, %cst_64 {dimension_numbers = #tpu.dot_dimension_numbers<[1], [0], [0], [1], [0, 0, 1, 1], [], []>} : vector<8x32xbf16>, vector<32x128xbf16>, vector<8x128xf32> -> vector<8x128xf32>
    %335 = arith.addf %332, %334 : vector<8x128xf32>
    %336 = arith.addf %335, %6 : vector<8x128xf32>
    %337 = vector.extract_strided_slice %336 {offsets = [0, 0], sizes = [8, 96], strides = [1, 1]} : vector<8x128xf32> to vector<8x96xf32>
    %338 = arith.negf %337 : vector<8x96xf32>
    %339 = math.exp %338 : vector<8x96xf32>
    %cst_65 = arith.constant 1.000000e+00 : f32
    %340 = vector.broadcast %cst_65 : f32 to vector<8x96xf32>
    %341 = arith.addf %340, %339 : vector<8x96xf32>
    %342 = arith.divf %340, %341 : vector<8x96xf32>
    %343 = vector.extract_strided_slice %336 {offsets = [0, 96], sizes = [8, 32], strides = [1, 1]} : vector<8x128xf32> to vector<8x32xf32>
    %344 = math.tanh %343 : vector<8x32xf32>
    %345 = vector.extract_strided_slice %342 {offsets = [0, 0], sizes = [8, 32], strides = [1, 1]} : vector<8x96xf32> to vector<8x32xf32>
    %346 = vector.extract_strided_slice %342 {offsets = [0, 32], sizes = [8, 32], strides = [1, 1]} : vector<8x96xf32> to vector<8x32xf32>
    %347 = vector.extract_strided_slice %342 {offsets = [0, 64], sizes = [8, 32], strides = [1, 1]} : vector<8x96xf32> to vector<8x32xf32>
    %348 = arith.mulf %346, %308 : vector<8x32xf32>
    %349 = arith.mulf %345, %344 : vector<8x32xf32>
    %350 = arith.addf %348, %349 : vector<8x32xf32>
    %351 = math.tanh %350 : vector<8x32xf32>
    %352 = arith.mulf %347, %351 : vector<8x32xf32>
    %c0_66 = arith.constant 0 : index
    %c0_67 = arith.constant 0 : index
    %353 = vector.load %arg3[%c0_66, %c0_67] : memref<32x4xf32, #tpu.memory_space<vmem>>, vector<32x4xf32>
    %cst_68 = arith.constant dense<0.000000e+00> : vector<8x4xf32>
    %354 = tpu.matmul %352, %353, %cst_68 {dimension_numbers = #tpu.dot_dimension_numbers<[1], [0], [0], [1], [0, 0, 1, 1], [], []>} : vector<8x32xf32>, vector<32x4xf32>, vector<8x4xf32> -> vector<8x4xf32>
    %c0_69 = arith.constant 0 : index
    %c0_70 = arith.constant 0 : index
    %355 = vector.load %arg4[%c0_69, %c0_70] : memref<1x4xf32, #tpu.memory_space<vmem>>, vector<1x4xf32>
    %356 = vector.broadcast %355 : vector<1x4xf32> to vector<8x4xf32>
    %357 = arith.addf %354, %356 : vector<8x4xf32>
    %c0_71 = arith.constant 0 : index
    %c0_72 = arith.constant 0 : index
    %358 = vector.load %arg5[%c0_71, %c0_72] : memref<8x4xf32, #tpu.memory_space<vmem>>, vector<8x4xf32>
    tpu.vector_store %arg5[%c0_71, %c0_72], %357 {strides = array<i32>} : memref<8x4xf32, #tpu.memory_space<vmem>>, vector<8x4xf32>,
    return
  }
}

</mosaic_0001>

<llo_original>
// kernel: tpu_custom_call.1
$region0: #{tpu_custom_call.1}
  #allocation0 [shape = 'u32[]', space=smem, size = 0x4, offset = 0x4, fixed_abs, tag = 'smem constant byte address 0x4 - core index']
  #allocation1 [shape = 'u32[144,128]{1,0:T(1,128)}', space=vmem, size = 0x12000, scoped, tag = 'internal scratch']
  #allocation2 [shape = 'f32[64,128]{1,0:T(8,128)}', space=vmem, size = 0x8000, scoped, tag = 'scratch operand']
  %s0 = inlined_call_operand.vmem [shape: bf16[64,16], index: 0, kind: input, shape index: {}]
  %s1 = inlined_call_operand.vmem [shape: bf16[112,128], index: 1, kind: input, shape index: {}]
  %s2 = inlined_call_operand.vmem [shape: f32[2,128], index: 2, kind: input, shape index: {}]
  %s3 = inlined_call_operand.vmem [shape: f32[32,4], index: 3, kind: input, shape index: {}]
  %s4 = inlined_call_operand.vmem [shape: f32[1,4], index: 4, kind: input, shape index: {}]
  %s5 = inlined_call_operand.vmem [shape: f32[8,4], index: 5, kind: output, shape index: {}]
  %s6 = sld [smem:[#allocation0]]
  $region30: #{tpu_custom_call.1} parent=0
    _
  %s8 = ssub.s32 1, %s6
  %s9 = scalar_select 0, %s8, %s6
  // Predicated region
  $region2: #{tpu_custom_call.1} parent=0 // pred_check
    _
  $region3: #{tpu_custom_call.1} parent=0 // pred_check_branch
    %11 = sbr.rel (0) target = $region5
  $region4: #{tpu_custom_call.1} parent=0 // pred_region
    _
  $region5: #{tpu_custom_call.1} parent=0 // pred_fallthru
    _
  // Predicated region
  $region6: #{tpu_custom_call.1} parent=0 // pred_check
    _
  $region7: #{tpu_custom_call.1} parent=0 // pred_check_branch
    %13 = sbr.rel (0) target = $region9
  $region8: #{tpu_custom_call.1} parent=0 // pred_region
    _
  $region9: #{tpu_custom_call.1} parent=0 // pred_fallthru
    _
  // Predicated region
  $region10: #{tpu_custom_call.1} parent=0 // pred_check
    _
  $region11: #{tpu_custom_call.1} parent=0 // pred_check_branch
    %15 = sbr.rel (0) target = $region13
  $region12: #{tpu_custom_call.1} parent=0 // pred_region
    _
  $region13: #{tpu_custom_call.1} parent=0 // pred_fallthru
    _
  // Predicated region
  $region14: #{tpu_custom_call.1} parent=0 // pred_check
    _
  $region15: #{tpu_custom_call.1} parent=0 // pred_check_branch
    %17 = sbr.rel (0) target = $region17
  $region16: #{tpu_custom_call.1} parent=0 // pred_region
    _
  $region17: #{tpu_custom_call.1} parent=0 // pred_fallthru
    _
  // Predicated region
  $region18: #{tpu_custom_call.1} parent=0 // pred_check
    _
  $region19: #{tpu_custom_call.1} parent=0 // pred_check_branch
    %19 = sbr.rel (0) target = $region21
  $region20: #{tpu_custom_call.1} parent=0 // pred_region
    _
  $region21: #{tpu_custom_call.1} parent=0 // pred_fallthru
    _
  %v21 = vld [vmem:[%s1] sm:$0xf]
  %v22 = vld [vmem:[%s1 + $0x4] sm:$0xf]
  %v23 = vld [vmem:[%s1 + $0x8] sm:$0xf]
  %v24 = vld [vmem:[%s1 + $0xc] sm:$0xf]
  %v25 = vld [vmem:[%s1 + $0x10] sm:$0xf]
  %v26 = vld [vmem:[%s1 + $0x14] sm:$0xf]
  %v27 = vld [vmem:[%s1 + $0x18] sm:$0xf]
  %v28 = vld [vmem:[%s1 + $0x1c] sm:$0xf]
  %v29 = vld [vmem:[%s1 + $0x20] sm:$0xf]
  %v30 = vld [vmem:[%s1 + $0x24] sm:$0xf]
  %v31 = vld [vmem:[%s1 + $0x28] sm:$0xf]
  %v32 = vld [vmem:[%s1 + $0x2c] sm:$0xf]
  %v33 = vld [vmem:[%s1 + $0x30] sm:$0xf]
  %v34 = vld [vmem:[%s1 + $0x34] sm:$0xf]
  %v35 = vld [vmem:[%s2 + $0x1] sm:$0x1]
  %v36 = vlaneseq
  %v37 = vshrl.u32 %v36, 7
  %v38 = vsub.s32 0, %v37
  %v39 = vrot.slane %v35, %v38
  %v40 = vld [vmem:[%s0] sm:$0xf]
  %v41 = vld [vmem:[%s0 + $0x4] sm:$0xf]
  %v42 = vld [vmem:[%s0 + $0x8] sm:$0xf]
  %v43 = vld [vmem:[%s0 + $0xc] sm:$0xf]
  %v44 = vld [vmem:[%s0 + $0x10] sm:$0xf]
  %v45 = vld [vmem:[%s0 + $0x14] sm:$0xf]
  %v46 = vld [vmem:[%s0 + $0x18] sm:$0xf]
  %v47 = vld [vmem:[%s0 + $0x1c] sm:$0xf]
  %v48 = vld [vmem:[%s2] sm:$0x1]
  %v49 = vlaneseq
  %v50 = vshrl.u32 %v49, 7
  %v51 = vsub.s32 0, %v50
  %v52 = vrot.slane %v48, %v51
  %v61 = vunpack.c.l.b16 %v40
  %v62 = vunpack.c.l.b16 %v41
  %v63 = vunpack.c.l.b16 %v42
  %v64 = vunpack.c.l.b16 %v43
  %v65 = vunpack.c.l.b16 %v44
  %v66 = vunpack.c.l.b16 %v45
  %v67 = vunpack.c.l.b16 %v46
  %v68 = vunpack.c.l.b16 %v47
  %v69 = vpack.c.b16 %v62, %v61
  %v70 = vpack.c.b16 %v64, %v63
  %v71 = vpack.c.b16 %v66, %v65
  %v72 = vpack.c.b16 %v68, %v67
  %v75 = vunpack.c.l.b16 %v21
  %v76 = vunpack.c.l.b16 %v22
  %v77 = vpack.c.b16 %v76, %v75
  %vm79 = vcmask 130048
  %v81 = vsel %vm79, %v69, 0
  %v84 = vsel %vm79, %v70, 0
  %v87 = vsel %vm79, %v71, 0
  %v90 = vsel %vm79, %v72, 0
  %92 = vmatprep.subr.bf16.mxu0 0
  %93 = vmatpush1.bf16.msra.mxu0 %v77
  %94 = vmatprep.subr.bf16.mxu0 0
  %95 = vmatpush1.bf16.msra.mxu0 0
  %96 = vmatprep.subr.bf16.mxu0 0
  %97 = vmatpush1.bf16.msra.mxu0 0
  %98 = vmatprep.subr.bf16.mxu0 0
  %99 = vmatpush1.bf16.msra.mxu0 0
  %100 = vmatprep.subr.bf16.mxu0 0
  %101 = vmatpush1.bf16.msra.mxu0 0
  %102 = vmatprep.subr.bf16.mxu0 0
  %103 = vmatpush1.bf16.msra.mxu0 0
  %104 = vmatprep.subr.bf16.mxu0 0
  %105 = vmatpush1.bf16.msra.mxu0 0
  %106 = vmatprep.subr.bf16.mxu0 0
  %107 = vmatpush1.bf16.msra.mxu0 0
  %108 = vmatprep.subr.bf16.mxu0 0
  %109 = vmatpush1.bf16.msra.mxu0 0
  %110 = vmatprep.subr.bf16.mxu0 0
  %111 = vmatpush1.bf16.msra.mxu0 0
  %112 = vmatprep.subr.bf16.mxu0 0
  %113 = vmatpush1.bf16.msra.mxu0 0
  %114 = vmatprep.subr.bf16.mxu0 0
  %115 = vmatpush1.bf16.msra.mxu0 0
  %116 = vmatprep.subr.bf16.mxu0 0
  %117 = vmatpush1.bf16.msra.mxu0 0
  %118 = vmatprep.subr.bf16.mxu0 0
  %119 = vmatpush1.bf16.msra.mxu0 0
  %120 = vmatprep.subr.bf16.mxu0 0
  %121 = vmatpush1.bf16.msra.mxu0 0
  %122 = vmatprep.subr.bf16.mxu0 0
  %123 = vmatpush1.bf16.msra.mxu0 0
  %124 = vmatprep.mubr.bf16.mxu0 0
  %125 = vmatmul.mubr.bf16.gmra.mrb[0].mxu0 %v81
  %v126 = vpop.f32.mrb[0].mxu0
  %v127 = vadd.f32 %v52, %v126
  %v128 = vpop.f32.mrb[0].mxu0
  %v129 = vpop.f32.mrb[0].mxu0
  %v130 = vadd.f32 %v52, %v129
  %v131 = vpop.f32.mrb[0].mxu0
  %132 = vmatprep.mubr.bf16.mxu0 0
  %133 = vmatmul.mubr.bf16.gmra.mrb[0].mxu0 %v84
  %v134 = vpop.f32.mrb[0].mxu0
  %v135 = vadd.f32 %v52, %v134
  %v136 = vpop.f32.mrb[0].mxu0
  %v137 = vpop.f32.mrb[0].mxu0
  %v138 = vadd.f32 %v52, %v137
  %v139 = vpop.f32.mrb[0].mxu0
  %140 = vmatprep.mubr.bf16.mxu0 0
  %141 = vmatmul.mubr.bf16.gmra.mrb[0].mxu0 %v87
  %v142 = vpop.f32.mrb[0].mxu0
  %v143 = vadd.f32 %v52, %v142
  %v144 = vpop.f32.mrb[0].mxu0
  %v145 = vpop.f32.mrb[0].mxu0
  %v146 = vadd.f32 %v52, %v145
  %v147 = vpop.f32.mrb[0].mxu0
  %148 = vmatprep.mubr.bf16.mxu0 0
  %149 = vmatmul.mubr.bf16.gmra.mrb[0].mxu0 %v90
  %v150 = vpop.f32.mrb[0].mxu0
  %v151 = vadd.f32 %v52, %v150
  %v152 = vpop.f32.mrb[0].mxu0
  %v153 = vpop.f32.mrb[0].mxu0
  %v154 = vadd.f32 %v52, %v153
  %v155 = vpop.f32.mrb[0].mxu0
  %156 = vdwg.mxu0
  %157 = vst [vmem:[#allocation2] sm:$0xff] %v127
  %158 = vst [vmem:[#allocation2 + $0x8] sm:$0xff] %v130
  %159 = vst [vmem:[#allocation2 + $0x10] sm:$0xff] %v135
  %160 = vst [vmem:[#allocation2 + $0x18] sm:$0xff] %v138
  %161 = vst [vmem:[#allocation2 + $0x20] sm:$0xff] %v143
  %162 = vst [vmem:[#allocation2 + $0x28] sm:$0xff] %v146
  %163 = vst [vmem:[#allocation2 + $0x30] sm:$0xff] %v151
  %164 = vst [vmem:[#allocation2 + $0x38] sm:$0xff] %v154
  %v165 = vld [vmem:[#allocation2] sm:$0xff]
  %v170 = vunpack.c.l.b16 %v23
  %v171 = vunpack.c.l.b16 %v24
  %v172 = vunpack.c.l.b16 %v25
  %v173 = vunpack.c.l.b16 %v26
  %v174 = vpack.c.b16 %v171, %v170
  %v175 = vpack.c.b16 %v173, %v172
  %vm178 = vcmask 261120
  %v180 = vsel %vm178, 0, 0
  %182 = vmatprep.subr.bf16.mxu0 0
  %183 = vmatpush1.bf16.msra.mxu0 %v174
  %184 = vmatprep.subr.bf16.mxu0 0
  %185 = vmatpush1.bf16.msra.mxu0 %v175
  %186 = vmatprep.subr.bf16.mxu0 0
  %187 = vmatpush1.bf16.msra.mxu0 0
  %188 = vmatprep.subr.bf16.mxu0 0
  %189 = vmatpush1.bf16.msra.mxu0 0
  %190 = vmatprep.subr.bf16.mxu0 0
  %191 = vmatpush1.bf16.msra.mxu0 0
  %192 = vmatprep.subr.bf16.mxu0 0
  %193 = vmatpush1.bf16.msra.mxu0 0
  %194 = vmatprep.subr.bf16.mxu0 0
  %195 = vmatpush1.bf16.msra.mxu0 0
  %196 = vmatprep.subr.bf16.mxu0 0
  %197 = vmatpush1.bf16.msra.mxu0 0
  %198 = vmatprep.subr.bf16.mxu0 0
  %199 = vmatpush1.bf16.msra.mxu0 0
  %200 = vmatprep.subr.bf16.mxu0 0
  %201 = vmatpush1.bf16.msra.mxu0 0
  %202 = vmatprep.subr.bf16.mxu0 0
  %203 = vmatpush1.bf16.msra.mxu0 0
  %204 = vmatprep.subr.bf16.mxu0 0
  %205 = vmatpush1.bf16.msra.mxu0 0
  %206 = vmatprep.subr.bf16.mxu0 0
  %207 = vmatpush1.bf16.msra.mxu0 0
  %208 = vmatprep.subr.bf16.mxu0 0
  %209 = vmatpush1.bf16.msra.mxu0 0
  %210 = vmatprep.subr.bf16.mxu0 0
  %211 = vmatpush1.bf16.msra.mxu0 0
  %212 = vmatprep.subr.bf16.mxu0 0
  %213 = vmatpush1.bf16.msra.mxu0 0
  %214 = vmatprep.mubr.bf16.mxu0 0
  %215 = vmatmul.mubr.bf16.gmra.mrb[0].mxu0 %v180
  %v216 = vpop.f32.mrb[0].mxu0
  %v217 = vadd.f32 0.0, %v216
  %v218 = vpop.f32.mrb[0].mxu0
  %v219 = vpop.f32.mrb[0].mxu0
  %v220 = vpop.f32.mrb[0].mxu0
  %221 = vdwg.mxu0
  %v222 = vadd.f32 %v165, %v217
  %v223 = vxor.u32 %v222, 2147483648
  %v224 = vmul.f32 %v223, 1.442695
  %v225 = vpow.pop %v224
  %v226 = vadd.f32 %v225, 1.0
  %v227 = vrcp.pop %v226
  %v228 = vmul.f32 1.0, %v227
  %v229 = vtanh.pop %v222
  %v230 = vmul.f32 %v228, 0.0
  %232 = vrot.lane.b32.xlu0 %v229, 32
  %v233 = vpop.permute.xlu0 %232
  %v235 = vmul.f32 %v228, %v233
  %237 = vrot.lane.b32.xlu0 %v235, 32
  %v238 = vpop.permute.xlu0 %237
  %v240 = vadd.f32 %v230, %v238
  %v241 = vtanh.pop %v240
  %243 = vrot.lane.b32.xlu0 %v241, 32
  %v244 = vpop.permute.xlu0 %243
  %v246 = vmul.f32 %v228, %v244
  %v247 = vpack.c.bf16 %v246, %v246
  %v252 = vunpack.c.l.b16 %v31
  %v253 = vunpack.c.l.b16 %v32
  %v254 = vunpack.c.l.b16 %v33
  %v255 = vunpack.c.l.b16 %v34
  %v256 = vpack.c.b16 %v253, %v252
  %v257 = vpack.c.b16 %v255, %v254
  %260 = vmatprep.subr.bf16.mxu0 0
  %261 = vmatpush1.bf16.msra.mxu0 %v256
  %262 = vmatprep.subr.bf16.mxu0 0
  %263 = vmatpush1.bf16.msra.mxu0 %v257
  %264 = vmatprep.subr.bf16.mxu0 0
  %265 = vmatpush1.bf16.msra.mxu0 0
  %266 = vmatprep.subr.bf16.mxu0 0
  %267 = vmatpush1.bf16.msra.mxu0 0
  %268 = vmatprep.subr.bf16.mxu0 0
  %269 = vmatpush1.bf16.msra.mxu0 0
  %270 = vmatprep.subr.bf16.mxu0 0
  %271 = vmatpush1.bf16.msra.mxu0 0
  %272 = vmatprep.subr.bf16.mxu0 0
  %273 = vmatpush1.bf16.msra.mxu0 0
  %274 = vmatprep.subr.bf16.mxu0 0
  %275 = vmatpush1.bf16.msra.mxu0 0
  %276 = vmatprep.subr.bf16.mxu0 0
  %277 = vmatpush1.bf16.msra.mxu0 0
  %278 = vmatprep.subr.bf16.mxu0 0
  %279 = vmatpush1.bf16.msra.mxu0 0
  %280 = vmatprep.subr.bf16.mxu0 0
  %281 = vmatpush1.bf16.msra.mxu0 0
  %282 = vmatprep.subr.bf16.mxu0 0
  %283 = vmatpush1.bf16.msra.mxu0 0
  %284 = vmatprep.subr.bf16.mxu0 0
  %285 = vmatpush1.bf16.msra.mxu0 0
  %286 = vmatprep.subr.bf16.mxu0 0
  %287 = vmatpush1.bf16.msra.mxu0 0
  %288 = vmatprep.subr.bf16.mxu0 0
  %289 = vmatpush1.bf16.msra.mxu0 0
  %290 = vmatprep.subr.bf16.mxu0 0
  %291 = vmatpush1.bf16.msra.mxu0 0
  %292 = vmatprep.mubr.bf16.mxu0 0
  %293 = vmatmul.mubr.bf16.gmra.mrb[0].mxu0 %v180
  %v294 = vpop.f32.mrb[0].mxu0
  %v295 = vadd.f32 0.0, %v294
  %v296 = vpop.f32.mrb[0].mxu0
  %v297 = vpop.f32.mrb[0].mxu0
  %v298 = vpop.f32.mrb[0].mxu0
  %299 = vdwg.mxu0
  %301 = vrot.lane.b32.xlu0 %v247, 64
  %v302 = vpop.permute.xlu0 %301
  %v307 = vunpack.c.l.b16 %v27
  %v308 = vunpack.c.l.b16 %v28
  %v309 = vunpack.c.l.b16 %v29
  %v310 = vunpack.c.l.b16 %v30
  %v311 = vpack.c.b16 %v308, %v307
  %v312 = vpack.c.b16 %v310, %v309
  %v316 = vsel %vm178, %v302, 0
  %318 = vmatprep.subr.bf16.mxu0 0
  %319 = vmatpush1.bf16.msra.mxu0 %v311
  %320 = vmatprep.subr.bf16.mxu0 0
  %321 = vmatpush1.bf16.msra.mxu0 %v312
  %322 = vmatprep.subr.bf16.mxu0 0
  %323 = vmatpush1.bf16.msra.mxu0 0
  %324 = vmatprep.subr.bf16.mxu0 0
  %325 = vmatpush1.bf16.msra.mxu0 0
  %326 = vmatprep.subr.bf16.mxu0 0
  %327 = vmatpush1.bf16.msra.mxu0 0
  %328 = vmatprep.subr.bf16.mxu0 0
  %329 = vmatpush1.bf16.msra.mxu0 0
  %330 = vmatprep.subr.bf16.mxu0 0
  %331 = vmatpush1.bf16.msra.mxu0 0
  %332 = vmatprep.subr.bf16.mxu0 0
  %333 = vmatpush1.bf16.msra.mxu0 0
  %334 = vmatprep.subr.bf16.mxu0 0
  %335 = vmatpush1.bf16.msra.mxu0 0
  %336 = vmatprep.subr.bf16.mxu0 0
  %337 = vmatpush1.bf16.msra.mxu0 0
  %338 = vmatprep.subr.bf16.mxu0 0
  %339 = vmatpush1.bf16.msra.mxu0 0
  %340 = vmatprep.subr.bf16.mxu0 0
  %341 = vmatpush1.bf16.msra.mxu0 0
  %342 = vmatprep.subr.bf16.mxu0 0
  %343 = vmatpush1.bf16.msra.mxu0 0
  %344 = vmatprep.subr.bf16.mxu0 0
  %345 = vmatpush1.bf16.msra.mxu0 0
  %346 = vmatprep.subr.bf16.mxu0 0
  %347 = vmatpush1.bf16.msra.mxu0 0
  %348 = vmatprep.subr.bf16.mxu0 0
  %349 = vmatpush1.bf16.msra.mxu0 0
  %350 = vmatprep.mubr.bf16.mxu0 0
  %351 = vmatmul.mubr.bf16.gmra.mrb[0].mxu0 %v316
  %v352 = vpop.f32.mrb[0].mxu0
  %v353 = vadd.f32 %v295, %v352
  %v354 = vpop.f32.mrb[0].mxu0
  %v355 = vpop.f32.mrb[0].mxu0
  %v356 = vpop.f32.mrb[0].mxu0
  %357 = vdwg.mxu0
  %v358 = vadd.f32 %v353, %v39
  %v359 = vxor.u32 %v358, 2147483648
  %v360 = vmul.f32 %v359, 1.442695
  %v361 = vpow.pop %v360
  %v362 = vadd.f32 %v361, 1.0
  %v363 = vrcp.pop %v362
  %v364 = vmul.f32 1.0, %v363
  %v365 = vtanh.pop %v358
  %v366 = vmul.f32 %v364, 0.0
  %368 = vrot.lane.b32.xlu0 %v365, 32
  %v369 = vpop.permute.xlu0 %368
  %v371 = vmul.f32 %v364, %v369
  %373 = vrot.lane.b32.xlu0 %v371, 32
  %v374 = vpop.permute.xlu0 %373
  %v376 = vadd.f32 %v366, %v374
  %v377 = vtanh.pop %v376
  %379 = vrot.lane.b32.xlu0 %v377, 32
  %v380 = vpop.permute.xlu0 %379
  %v382 = vmul.f32 %v364, %v380
  %v383 = vld [vmem:[#allocation2 + $0x8] sm:$0xff]
  %384 = vmatprep.subr.bf16.mxu0 0
  %385 = vmatpush1.bf16.msra.mxu0 %v174
  %386 = vmatprep.subr.bf16.mxu0 0
  %387 = vmatpush1.bf16.msra.mxu0 %v175
  %388 = vmatprep.subr.bf16.mxu0 0
  %389 = vmatpush1.bf16.msra.mxu0 0
  %390 = vmatprep.subr.bf16.mxu0 0
  %391 = vmatpush1.bf16.msra.mxu0 0
  %392 = vmatprep.subr.bf16.mxu0 0
  %393 = vmatpush1.bf16.msra.mxu0 0
  %394 = vmatprep.subr.bf16.mxu0 0
  %395 = vmatpush1.bf16.msra.mxu0 0
  %396 = vmatprep.subr.bf16.mxu0 0
  %397 = vmatpush1.bf16.msra.mxu0 0
  %398 = vmatprep.subr.bf16.mxu0 0
  %399 = vmatpush1.bf16.msra.mxu0 0
  %400 = vmatprep.subr.bf16.mxu0 0
  %401 = vmatpush1.bf16.msra.mxu0 0
  %402 = vmatprep.subr.bf16.mxu0 0
  %403 = vmatpush1.bf16.msra.mxu0 0
  %404 = vmatprep.subr.bf16.mxu0 0
  %405 = vmatpush1.bf16.msra.mxu0 0
  %406 = vmatprep.subr.bf16.mxu0 0
  %407 = vmatpush1.bf16.msra.mxu0 0
  %408 = vmatprep.subr.bf16.mxu0 0
  %409 = vmatpush1.bf16.msra.mxu0 0
  %410 = vmatprep.subr.bf16.mxu0 0
  %411 = vmatpush1.bf16.msra.mxu0 0
  %412 = vmatprep.subr.bf16.mxu0 0
  %413 = vmatpush1.bf16.msra.mxu0 0
  %414 = vmatprep.subr.bf16.mxu0 0
  %415 = vmatpush1.bf16.msra.mxu0 0
  %416 = vmatprep.mubr.bf16.mxu0 0
  %417 = vmatmul.mubr.bf16.gmra.mrb[0].mxu0 %v316
  %v418 = vpop.f32.mrb[0].mxu0
  %v419 = vadd.f32 0.0, %v418
  %v420 = vpop.f32.mrb[0].mxu0
  %v421 = vpop.f32.mrb[0].mxu0
  %v422 = vpop.f32.mrb[0].mxu0
  %423 = vdwg.mxu0
  %v424 = vadd.f32 %v383, %v419
  %v425 = vxor.u32 %v424, 2147483648
  %v426 = vmul.f32 %v425, 1.442695
  %v427 = vpow.pop %v426
  %v428 = vadd.f32 %v427, 1.0
  %v429 = vrcp.pop %v428
  %v430 = vmul.f32 1.0, %v429
  %v431 = vtanh.pop %v424
  %v432 = vmul.f32 %v430, %v240
  %434 = vrot.lane.b32.xlu0 %v431, 32
  %v435 = vpop.permute.xlu0 %434
  %v437 = vmul.f32 %v430, %v435
  %439 = vrot.lane.b32.xlu0 %v437, 32
  %v440 = vpop.permute.xlu0 %439
  %v442 = vadd.f32 %v432, %v440
  %v443 = vtanh.pop %v442
  %445 = vrot.lane.b32.xlu0 %v443, 32
  %v446 = vpop.permute.xlu0 %445
  %v448 = vmul.f32 %v430, %v446
  %v449 = vpack.c.bf16 %v448, %v448
  %v450 = vpack.c.bf16 %v382, %v382
  %452 = vrot.lane.b32.xlu0 %v450, 64
  %v453 = vpop.permute.xlu0 %452
  %v455 = vsel %vm178, %v453, 0
  %457 = vmatprep.subr.bf16.mxu0 0
  %458 = vmatpush1.bf16.msra.mxu0 %v256
  %459 = vmatprep.subr.bf16.mxu0 0
  %460 = vmatpush1.bf16.msra.mxu0 %v257
  %461 = vmatprep.subr.bf16.mxu0 0
  %462 = vmatpush1.bf16.msra.mxu0 0
  %463 = vmatprep.subr.bf16.mxu0 0
  %464 = vmatpush1.bf16.msra.mxu0 0
  %465 = vmatprep.subr.bf16.mxu0 0
  %466 = vmatpush1.bf16.msra.mxu0 0
  %467 = vmatprep.subr.bf16.mxu0 0
  %468 = vmatpush1.bf16.msra.mxu0 0
  %469 = vmatprep.subr.bf16.mxu0 0
  %470 = vmatpush1.bf16.msra.mxu0 0
  %471 = vmatprep.subr.bf16.mxu0 0
  %472 = vmatpush1.bf16.msra.mxu0 0
  %473 = vmatprep.subr.bf16.mxu0 0
  %474 = vmatpush1.bf16.msra.mxu0 0
  %475 = vmatprep.subr.bf16.mxu0 0
  %476 = vmatpush1.bf16.msra.mxu0 0
  %477 = vmatprep.subr.bf16.mxu0 0
  %478 = vmatpush1.bf16.msra.mxu0 0
  %479 = vmatprep.subr.bf16.mxu0 0
  %480 = vmatpush1.bf16.msra.mxu0 0
  %481 = vmatprep.subr.bf16.mxu0 0
  %482 = vmatpush1.bf16.msra.mxu0 0
  %483 = vmatprep.subr.bf16.mxu0 0
  %484 = vmatpush1.bf16.msra.mxu0 0
  %485 = vmatprep.subr.bf16.mxu0 0
  %486 = vmatpush1.bf16.msra.mxu0 0
  %487 = vmatprep.subr.bf16.mxu0 0
  %488 = vmatpush1.bf16.msra.mxu0 0
  %489 = vmatprep.mubr.bf16.mxu0 0
  %490 = vmatmul.mubr.bf16.gmra.mrb[0].mxu0 %v455
  %v491 = vpop.f32.mrb[0].mxu0
  %v492 = vadd.f32 0.0, %v491
  %v493 = vpop.f32.mrb[0].mxu0
  %v494 = vpop.f32.mrb[0].mxu0
  %v495 = vpop.f32.mrb[0].mxu0
  %496 = vdwg.mxu0
  %498 = vrot.lane.b32.xlu0 %v449, 64
  %v499 = vpop.permute.xlu0 %498
  %v501 = vsel %vm178, %v499, 0
  %503 = vmatprep.subr.bf16.mxu0 0
  %504 = vmatpush1.bf16.msra.mxu0 %v311
  %505 = vmatprep.subr.bf16.mxu0 0
  %506 = vmatpush1.bf16.msra.mxu0 %v312
  %507 = vmatprep.subr.bf16.mxu0 0
  %508 = vmatpush1.bf16.msra.mxu0 0
  %509 = vmatprep.subr.bf16.mxu0 0
  %510 = vmatpush1.bf16.msra.mxu0 0
  %511 = vmatprep.subr.bf16.mxu0 0
  %512 = vmatpush1.bf16.msra.mxu0 0
  %513 = vmatprep.subr.bf16.mxu0 0
  %514 = vmatpush1.bf16.msra.mxu0 0
  %515 = vmatprep.subr.bf16.mxu0 0
  %516 = vmatpush1.bf16.msra.mxu0 0
  %517 = vmatprep.subr.bf16.mxu0 0
  %518 = vmatpush1.bf16.msra.mxu0 0
  %519 = vmatprep.subr.bf16.mxu0 0
  %520 = vmatpush1.bf16.msra.mxu0 0
  %521 = vmatprep.subr.bf16.mxu0 0
  %522 = vmatpush1.bf16.msra.mxu0 0
  %523 = vmatprep.subr.bf16.mxu0 0
  %524 = vmatpush1.bf16.msra.mxu0 0
  %525 = vmatprep.subr.bf16.mxu0 0
  %526 = vmatpush1.bf16.msra.mxu0 0
  %527 = vmatprep.subr.bf16.mxu0 0
  %528 = vmatpush1.bf16.msra.mxu0 0
  %529 = vmatprep.subr.bf16.mxu0 0
  %530 = vmatpush1.bf16.msra.mxu0 0
  %531 = vmatprep.subr.bf16.mxu0 0
  %532 = vmatpush1.bf16.msra.mxu0 0
  %533 = vmatprep.subr.bf16.mxu0 0
  %534 = vmatpush1.bf16.msra.mxu0 0
  %535 = vmatprep.mubr.bf16.mxu0 0
  %536 = vmatmul.mubr.bf16.gmra.mrb[0].mxu0 %v501
  %v537 = vpop.f32.mrb[0].mxu0
  %v538 = vadd.f32 %v492, %v537
  %v539 = vpop.f32.mrb[0].mxu0
  %v540 = vpop.f32.mrb[0].mxu0
  %v541 = vpop.f32.mrb[0].mxu0
  %542 = vdwg.mxu0
  %v543 = vadd.f32 %v538, %v39
  %v544 = vxor.u32 %v543, 2147483648
  %v545 = vmul.f32 %v544, 1.442695
  %v546 = vpow.pop %v545
  %v547 = vadd.f32 %v546, 1.0
  %v548 = vrcp.pop %v547
  %v549 = vmul.f32 1.0, %v548
  %v550 = vtanh.pop %v543
  %v551 = vmul.f32 %v549, %v376
  %553 = vrot.lane.b32.xlu0 %v550, 32
  %v554 = vpop.permute.xlu0 %553
  %v556 = vmul.f32 %v549, %v554
  %558 = vrot.lane.b32.xlu0 %v556, 32
  %v559 = vpop.permute.xlu0 %558
  %v561 = vadd.f32 %v551, %v559
  %v562 = vtanh.pop %v561
  %564 = vrot.lane.b32.xlu0 %v562, 32
  %v565 = vpop.permute.xlu0 %564
  %v567 = vmul.f32 %v549, %v565
  %v568 = vld [vmem:[#allocation2 + $0x10] sm:$0xff]
  %569 = vmatprep.subr.bf16.mxu0 0
  %570 = vmatpush1.bf16.msra.mxu0 %v174
  %571 = vmatprep.subr.bf16.mxu0 0
  %572 = vmatpush1.bf16.msra.mxu0 %v175
  %573 = vmatprep.subr.bf16.mxu0 0
  %574 = vmatpush1.bf16.msra.mxu0 0
  %575 = vmatprep.subr.bf16.mxu0 0
  %576 = vmatpush1.bf16.msra.mxu0 0
  %577 = vmatprep.subr.bf16.mxu0 0
  %578 = vmatpush1.bf16.msra.mxu0 0
  %579 = vmatprep.subr.bf16.mxu0 0
  %580 = vmatpush1.bf16.msra.mxu0 0
  %581 = vmatprep.subr.bf16.mxu0 0
  %582 = vmatpush1.bf16.msra.mxu0 0
  %583 = vmatprep.subr.bf16.mxu0 0
  %584 = vmatpush1.bf16.msra.mxu0 0
  %585 = vmatprep.subr.bf16.mxu0 0
  %586 = vmatpush1.bf16.msra.mxu0 0
  %587 = vmatprep.subr.bf16.mxu0 0
  %588 = vmatpush1.bf16.msra.mxu0 0
  %589 = vmatprep.subr.bf16.mxu0 0
  %590 = vmatpush1.bf16.msra.mxu0 0
  %591 = vmatprep.subr.bf16.mxu0 0
  %592 = vmatpush1.bf16.msra.mxu0 0
  %593 = vmatprep.subr.bf16.mxu0 0
  %594 = vmatpush1.bf16.msra.mxu0 0
  %595 = vmatprep.subr.bf16.mxu0 0
  %596 = vmatpush1.bf16.msra.mxu0 0
  %597 = vmatprep.subr.bf16.mxu0 0
  %598 = vmatpush1.bf16.msra.mxu0 0
  %599 = vmatprep.subr.bf16.mxu0 0
  %600 = vmatpush1.bf16.msra.mxu0 0
  %601 = vmatprep.mubr.bf16.mxu0 0
  %602 = vmatmul.mubr.bf16.gmra.mrb[0].mxu0 %v501
  %v603 = vpop.f32.mrb[0].mxu0
  %v604 = vadd.f32 0.0, %v603
  %v605 = vpop.f32.mrb[0].mxu0
  %v606 = vpop.f32.mrb[0].mxu0
  %v607 = vpop.f32.mrb[0].mxu0
  %608 = vdwg.mxu0
  %v609 = vadd.f32 %v568, %v604
  %v610 = vxor.u32 %v609, 2147483648
  %v611 = vmul.f32 %v610, 1.442695
  %v612 = vpow.pop %v611
  %v613 = vadd.f32 %v612, 1.0
  %v614 = vrcp.pop %v613
  %v615 = vmul.f32 1.0, %v614
  %v616 = vtanh.pop %v609
  %v617 = vmul.f32 %v615, %v442
  %619 = vrot.lane.b32.xlu0 %v616, 32
  %v620 = vpop.permute.xlu0 %619
  %v622 = vmul.f32 %v615, %v620
  %624 = vrot.lane.b32.xlu0 %v622, 32
  %v625 = vpop.permute.xlu0 %624
  %v627 = vadd.f32 %v617, %v625
  %v628 = vtanh.pop %v627
  %630 = vrot.lane.b32.xlu0 %v628, 32
  %v631 = vpop.permute.xlu0 %630
  %v633 = vmul.f32 %v615, %v631
  %v634 = vpack.c.bf16 %v633, %v633
  %v635 = vpack.c.bf16 %v567, %v567
  %637 = vrot.lane.b32.xlu0 %v635, 64
  %v638 = vpop.permute.xlu0 %637
  %v640 = vsel %vm178, %v638, 0
  %642 = vmatprep.subr.bf16.mxu0 0
  %643 = vmatpush1.bf16.msra.mxu0 %v256
  %644 = vmatprep.subr.bf16.mxu0 0
  %645 = vmatpush1.bf16.msra.mxu0 %v257
  %646 = vmatprep.subr.bf16.mxu0 0
  %647 = vmatpush1.bf16.msra.mxu0 0
  %648 = vmatprep.subr.bf16.mxu0 0
  %649 = vmatpush1.bf16.msra.mxu0 0
  %650 = vmatprep.subr.bf16.mxu0 0
  %651 = vmatpush1.bf16.msra.mxu0 0
  %652 = vmatprep.subr.bf16.mxu0 0
  %653 = vmatpush1.bf16.msra.mxu0 0
  %654 = vmatprep.subr.bf16.mxu0 0
  %655 = vmatpush1.bf16.msra.mxu0 0
  %656 = vmatprep.subr.bf16.mxu0 0
  %657 = vmatpush1.bf16.msra.mxu0 0
  %658 = vmatprep.subr.bf16.mxu0 0
  %659 = vmatpush1.bf16.msra.mxu0 0
  %660 = vmatprep.subr.bf16.mxu0 0
  %661 = vmatpush1.bf16.msra.mxu0 0
  %662 = vmatprep.subr.bf16.mxu0 0
  %663 = vmatpush1.bf16.msra.mxu0 0
  %664 = vmatprep.subr.bf16.mxu0 0
  %665 = vmatpush1.bf16.msra.mxu0 0
  %666 = vmatprep.subr.bf16.mxu0 0
  %667 = vmatpush1.bf16.msra.mxu0 0
  %668 = vmatprep.subr.bf16.mxu0 0
  %669 = vmatpush1.bf16.msra.mxu0 0
  %670 = vmatprep.subr.bf16.mxu0 0
  %671 = vmatpush1.bf16.msra.mxu0 0
  %672 = vmatprep.subr.bf16.mxu0 0
  %673 = vmatpush1.bf16.msra.mxu0 0
  %674 = vmatprep.mubr.bf16.mxu0 0
  %675 = vmatmul.mubr.bf16.gmra.mrb[0].mxu0 %v640
  %v676 = vpop.f32.mrb[0].mxu0
  %v677 = vadd.f32 0.0, %v676
  %v678 = vpop.f32.mrb[0].mxu0
  %v679 = vpop.f32.mrb[0].mxu0
  %v680 = vpop.f32.mrb[0].mxu0
  %681 = vdwg.mxu0
  %683 = vrot.lane.b32.xlu0 %v634, 64
  %v684 = vpop.permute.xlu0 %683
  %v686 = vsel %vm178, %v684, 0
  %688 = vmatprep.subr.bf16.mxu0 0
  %689 = vmatpush1.bf16.msra.mxu0 %v311
  %690 = vmatprep.subr.bf16.mxu0 0
  %691 = vmatpush1.bf16.msra.mxu0 %v312
  %692 = vmatprep.subr.bf16.mxu0 0
  %693 = vmatpush1.bf16.msra.mxu0 0
  %694 = vmatprep.subr.bf16.mxu0 0
  %695 = vmatpush1.bf16.msra.mxu0 0
  %696 = vmatprep.subr.bf16.mxu0 0
  %697 = vmatpush1.bf16.msra.mxu0 0
  %698 = vmatprep.subr.bf16.mxu0 0
  %699 = vmatpush1.bf16.msra.mxu0 0
  %700 = vmatprep.subr.bf16.mxu0 0
  %701 = vmatpush1.bf16.msra.mxu0 0
  %702 = vmatprep.subr.bf16.mxu0 0
  %703 = vmatpush1.bf16.msra.mxu0 0
  %704 = vmatprep.subr.bf16.mxu0 0
  %705 = vmatpush1.bf16.msra.mxu0 0
  %706 = vmatprep.subr.bf16.mxu0 0
  %707 = vmatpush1.bf16.msra.mxu0 0
  %708 = vmatprep.subr.bf16.mxu0 0
  %709 = vmatpush1.bf16.msra.mxu0 0
  %710 = vmatprep.subr.bf16.mxu0 0
  %711 = vmatpush1.bf16.msra.mxu0 0
  %712 = vmatprep.subr.bf16.mxu0 0
  %713 = vmatpush1.bf16.msra.mxu0 0
  %714 = vmatprep.subr.bf16.mxu0 0
  %715 = vmatpush1.bf16.msra.mxu0 0
  %716 = vmatprep.subr.bf16.mxu0 0
  %717 = vmatpush1.bf16.msra.mxu0 0
  %718 = vmatprep.subr.bf16.mxu0 0
  %719 = vmatpush1.bf16.msra.mxu0 0
  %720 = vmatprep.mubr.bf16.mxu0 0
  %721 = vmatmul.mubr.bf16.gmra.mrb[0].mxu0 %v686
  %v722 = vpop.f32.mrb[0].mxu0
  %v723 = vadd.f32 %v677, %v722
  %v724 = vpop.f32.mrb[0].mxu0
  %v725 = vpop.f32.mrb[0].mxu0
  %v726 = vpop.f32.mrb[0].mxu0
  %727 = vdwg.mxu0
  %v728 = vadd.f32 %v723, %v39
  %v729 = vxor.u32 %v728, 2147483648
  %v730 = vmul.f32 %v729, 1.442695
  %v731 = vpow.pop %v730
  %v732 = vadd.f32 %v731, 1.0
  %v733 = vrcp.pop %v732
  %v734 = vmul.f32 1.0, %v733
  %v735 = vtanh.pop %v728
  %v736 = vmul.f32 %v734, %v561
  %738 = vrot.lane.b32.xlu0 %v735, 32
  %v739 = vpop.permute.xlu0 %738
  %v741 = vmul.f32 %v734, %v739
  %743 = vrot.lane.b32.xlu0 %v741, 32
  %v744 = vpop.permute.xlu0 %743
  %v746 = vadd.f32 %v736, %v744
  %v747 = vtanh.pop %v746
  %749 = vrot.lane.b32.xlu0 %v747, 32
  %v750 = vpop.permute.xlu0 %749
  %v752 = vmul.f32 %v734, %v750
  %v753 = vld [vmem:[#allocation2 + $0x18] sm:$0xff]
  %754 = vmatprep.subr.bf16.mxu0 0
  %755 = vmatpush1.bf16.msra.mxu0 %v174
  %756 = vmatprep.subr.bf16.mxu0 0
  %757 = vmatpush1.bf16.msra.mxu0 %v175
  %758 = vmatprep.subr.bf16.mxu0 0
  %759 = vmatpush1.bf16.msra.mxu0 0
  %760 = vmatprep.subr.bf16.mxu0 0
  %761 = vmatpush1.bf16.msra.mxu0 0
  %762 = vmatprep.subr.bf16.mxu0 0
  %763 = vmatpush1.bf16.msra.mxu0 0
  %764 = vmatprep.subr.bf16.mxu0 0
  %765 = vmatpush1.bf16.msra.mxu0 0
  %766 = vmatprep.subr.bf16.mxu0 0
  %767 = vmatpush1.bf16.msra.mxu0 0
  %768 = vmatprep.subr.bf16.mxu0 0
  %769 = vmatpush1.bf16.msra.mxu0 0
  %770 = vmatprep.subr.bf16.mxu0 0
  %771 = vmatpush1.bf16.msra.mxu0 0
  %772 = vmatprep.subr.bf16.mxu0 0
  %773 = vmatpush1.bf16.msra.mxu0 0
  %774 = vmatprep.subr.bf16.mxu0 0
  %775 = vmatpush1.bf16.msra.mxu0 0
  %776 = vmatprep.subr.bf16.mxu0 0
  %777 = vmatpush1.bf16.msra.mxu0 0
  %778 = vmatprep.subr.bf16.mxu0 0
  %779 = vmatpush1.bf16.msra.mxu0 0
  %780 = vmatprep.subr.bf16.mxu0 0
  %781 = vmatpush1.bf16.msra.mxu0 0
  %782 = vmatprep.subr.bf16.mxu0 0
  %783 = vmatpush1.bf16.msra.mxu0 0
  %784 = vmatprep.subr.bf16.mxu0 0
  %785 = vmatpush1.bf16.msra.mxu0 0
  %786 = vmatprep.mubr.bf16.mxu0 0
  %787 = vmatmul.mubr.bf16.gmra.mrb[0].mxu0 %v686
  %v788 = vpop.f32.mrb[0].mxu0
  %v789 = vadd.f32 0.0, %v788
  %v790 = vpop.f32.mrb[0].mxu0
  %v791 = vpop.f32.mrb[0].mxu0
  %v792 = vpop.f32.mrb[0].mxu0
  %793 = vdwg.mxu0
  %v794 = vadd.f32 %v753, %v789
  %v795 = vxor.u32 %v794, 2147483648
  %v796 = vmul.f32 %v795, 1.442695
  %v797 = vpow.pop %v796
  %v798 = vadd.f32 %v797, 1.0
  %v799 = vrcp.pop %v798
  %v800 = vmul.f32 1.0, %v799
  %v801 = vtanh.pop %v794
  %v802 = vmul.f32 %v800, %v627
  %804 = vrot.lane.b32.xlu0 %v801, 32
  %v805 = vpop.permute.xlu0 %804
  %v807 = vmul.f32 %v800, %v805
  %809 = vrot.lane.b32.xlu0 %v807, 32
  %v810 = vpop.permute.xlu0 %809
  %v812 = vadd.f32 %v802, %v810
  %v813 = vtanh.pop %v812
  %815 = vrot.lane.b32.xlu0 %v813, 32
  %v816 = vpop.permute.xlu0 %815
  %v818 = vmul.f32 %v800, %v816
  %v819 = vpack.c.bf16 %v818, %v818
  %v820 = vpack.c.bf16 %v752, %v752
  %822 = vrot.lane.b32.xlu0 %v820, 64
  %v823 = vpop.permute.xlu0 %822
  %v825 = vsel %vm178, %v823, 0
  %827 = vmatprep.subr.bf16.mxu0 0
  %828 = vmatpush1.bf16.msra.mxu0 %v256
  %829 = vmatprep.subr.bf16.mxu0 0
  %830 = vmatpush1.bf16.msra.mxu0 %v257
  %831 = vmatprep.subr.bf16.mxu0 0
  %832 = vmatpush1.bf16.msra.mxu0 0
  %833 = vmatprep.subr.bf16.mxu0 0
  %834 = vmatpush1.bf16.msra.mxu0 0
  %835 = vmatprep.subr.bf16.mxu0 0
  %836 = vmatpush1.bf16.msra.mxu0 0
  %837 = vmatprep.subr.bf16.mxu0 0
  %838 = vmatpush1.bf16.msra.mxu0 0
  %839 = vmatprep.subr.bf16.mxu0 0
  %840 = vmatpush1.bf16.msra.mxu0 0
  %841 = vmatprep.subr.bf16.mxu0 0
  %842 = vmatpush1.bf16.msra.mxu0 0
  %843 = vmatprep.subr.bf16.mxu0 0
  %844 = vmatpush1.bf16.msra.mxu0 0
  %845 = vmatprep.subr.bf16.mxu0 0
  %846 = vmatpush1.bf16.msra.mxu0 0
  %847 = vmatprep.subr.bf16.mxu0 0
  %848 = vmatpush1.bf16.msra.mxu0 0
  %849 = vmatprep.subr.bf16.mxu0 0
  %850 = vmatpush1.bf16.msra.mxu0 0
  %851 = vmatprep.subr.bf16.mxu0 0
  %852 = vmatpush1.bf16.msra.mxu0 0
  %853 = vmatprep.subr.bf16.mxu0 0
  %854 = vmatpush1.bf16.msra.mxu0 0
  %855 = vmatprep.subr.bf16.mxu0 0
  %856 = vmatpush1.bf16.msra.mxu0 0
  %857 = vmatprep.subr.bf16.mxu0 0
  %858 = vmatpush1.bf16.msra.mxu0 0
  %859 = vmatprep.mubr.bf16.mxu0 0
  %860 = vmatmul.mubr.bf16.gmra.mrb[0].mxu0 %v825
  %v861 = vpop.f32.mrb[0].mxu0
  %v862 = vadd.f32 0.0, %v861
  %v863 = vpop.f32.mrb[0].mxu0
  %v864 = vpop.f32.mrb[0].mxu0
  %v865 = vpop.f32.mrb[0].mxu0
  %866 = vdwg.mxu0
  %868 = vrot.lane.b32.xlu0 %v819, 64
  %v869 = vpop.permute.xlu0 %868
  %v871 = vsel %vm178, %v869, 0
  %873 = vmatprep.subr.bf16.mxu0 0
  %874 = vmatpush1.bf16.msra.mxu0 %v311
  %875 = vmatprep.subr.bf16.mxu0 0
  %876 = vmatpush1.bf16.msra.mxu0 %v312
  %877 = vmatprep.subr.bf16.mxu0 0
  %878 = vmatpush1.bf16.msra.mxu0 0
  %879 = vmatprep.subr.bf16.mxu0 0
  %880 = vmatpush1.bf16.msra.mxu0 0
  %881 = vmatprep.subr.bf16.mxu0 0
  %882 = vmatpush1.bf16.msra.mxu0 0
  %883 = vmatprep.subr.bf16.mxu0 0
  %884 = vmatpush1.bf16.msra.mxu0 0
  %885 = vmatprep.subr.bf16.mxu0 0
  %886 = vmatpush1.bf16.msra.mxu0 0
  %887 = vmatprep.subr.bf16.mxu0 0
  %888 = vmatpush1.bf16.msra.mxu0 0
  %889 = vmatprep.subr.bf16.mxu0 0
  %890 = vmatpush1.bf16.msra.mxu0 0
  %891 = vmatprep.subr.bf16.mxu0 0
  %892 = vmatpush1.bf16.msra.mxu0 0
  %893 = vmatprep.subr.bf16.mxu0 0
  %894 = vmatpush1.bf16.msra.mxu0 0
  %895 = vmatprep.subr.bf16.mxu0 0
  %896 = vmatpush1.bf16.msra.mxu0 0
  %897 = vmatprep.subr.bf16.mxu0 0
  %898 = vmatpush1.bf16.msra.mxu0 0
  %899 = vmatprep.subr.bf16.mxu0 0
  %900 = vmatpush1.bf16.msra.mxu0 0
  %901 = vmatprep.subr.bf16.mxu0 0
  %902 = vmatpush1.bf16.msra.mxu0 0
  %903 = vmatprep.subr.bf16.mxu0 0
  %904 = vmatpush1.bf16.msra.mxu0 0
  %905 = vmatprep.mubr.bf16.mxu0 0
  %906 = vmatmul.mubr.bf16.gmra.mrb[0].mxu0 %v871
  %v907 = vpop.f32.mrb[0].mxu0
  %v908 = vadd.f32 %v862, %v907
  %v909 = vpop.f32.mrb[0].mxu0
  %v910 = vpop.f32.mrb[0].mxu0
  %v911 = vpop.f32.mrb[0].mxu0
  %912 = vdwg.mxu0
  %v913 = vadd.f32 %v908, %v39
  %v914 = vxor.u32 %v913, 2147483648
  %v915 = vmul.f32 %v914, 1.442695
  %v916 = vpow.pop %v915
  %v917 = vadd.f32 %v916, 1.0
  %v918 = vrcp.pop %v917
  %v919 = vmul.f32 1.0, %v918
  %v920 = vtanh.pop %v913
  %v921 = vmul.f32 %v919, %v746
  %923 = vrot.lane.b32.xlu0 %v920, 32
  %v924 = vpop.permute.xlu0 %923
  %v926 = vmul.f32 %v919, %v924
  %928 = vrot.lane.b32.xlu0 %v926, 32
  %v929 = vpop.permute.xlu0 %928
  %v931 = vadd.f32 %v921, %v929
  %v932 = vtanh.pop %v931
  %934 = vrot.lane.b32.xlu0 %v932, 32
  %v935 = vpop.permute.xlu0 %934
  %v937 = vmul.f32 %v919, %v935
  %v938 = vld [vmem:[#allocation2 + $0x20] sm:$0xff]
  %939 = vmatprep.subr.bf16.mxu0 0
  %940 = vmatpush1.bf16.msra.mxu0 %v174
  %941 = vmatprep.subr.bf16.mxu0 0
  %942 = vmatpush1.bf16.msra.mxu0 %v175
  %943 = vmatprep.subr.bf16.mxu0 0
  %944 = vmatpush1.bf16.msra.mxu0 0
  %945 = vmatprep.subr.bf16.mxu0 0
  %946 = vmatpush1.bf16.msra.mxu0 0
  %947 = vmatprep.subr.bf16.mxu0 0
  %948 = vmatpush1.bf16.msra.mxu0 0
  %949 = vmatprep.subr.bf16.mxu0 0
  %950 = vmatpush1.bf16.msra.mxu0 0
  %951 = vmatprep.subr.bf16.mxu0 0
  %952 = vmatpush1.bf16.msra.mxu0 0
  %953 = vmatprep.subr.bf16.mxu0 0
  %954 = vmatpush1.bf16.msra.mxu0 0
  %955 = vmatprep.subr.bf16.mxu0 0
  %956 = vmatpush1.bf16.msra.mxu0 0
  %957 = vmatprep.subr.bf16.mxu0 0
  %958 = vmatpush1.bf16.msra.mxu0 0
  %959 = vmatprep.subr.bf16.mxu0 0
  %960 = vmatpush1.bf16.msra.mxu0 0
  %961 = vmatprep.subr.bf16.mxu0 0
  %962 = vmatpush1.bf16.msra.mxu0 0
  %963 = vmatprep.subr.bf16.mxu0 0
  %964 = vmatpush1.bf16.msra.mxu0 0
  %965 = vmatprep.subr.bf16.mxu0 0
  %966 = vmatpush1.bf16.msra.mxu0 0
  %967 = vmatprep.subr.bf16.mxu0 0
  %968 = vmatpush1.bf16.msra.mxu0 0
  %969 = vmatprep.subr.bf16.mxu0 0
  %970 = vmatpush1.bf16.msra.mxu0 0
  %971 = vmatprep.mubr.bf16.mxu0 0
  %972 = vmatmul.mubr.bf16.gmra.mrb[0].mxu0 %v871
  %v973 = vpop.f32.mrb[0].mxu0
  %v974 = vadd.f32 0.0, %v973
  %v975 = vpop.f32.mrb[0].mxu0
  %v976 = vpop.f32.mrb[0].mxu0
  %v977 = vpop.f32.mrb[0].mxu0
  %978 = vdwg.mxu0
  %v979 = vadd.f32 %v938, %v974
  %v980 = vxor.u32 %v979, 2147483648
  %v981 = vmul.f32 %v980, 1.442695
  %v982 = vpow.pop %v981
  %v983 = vadd.f32 %v982, 1.0
  %v984 = vrcp.pop %v983
  %v985 = vmul.f32 1.0, %v984
  %v986 = vtanh.pop %v979
  %v987 = vmul.f32 %v985, %v812
  %989 = vrot.lane.b32.xlu0 %v986, 32
  %v990 = vpop.permute.xlu0 %989
  %v992 = vmul.f32 %v985, %v990
  %994 = vrot.lane.b32.xlu0 %v992, 32
  %v995 = vpop.permute.xlu0 %994
  %v997 = vadd.f32 %v987, %v995
  %v998 = vtanh.pop %v997
  %1000 = vrot.lane.b32.xlu0 %v998, 32
  %v1001 = vpop.permute.xlu0 %1000
  %v1003 = vmul.f32 %v985, %v1001
  %v1004 = vpack.c.bf16 %v1003, %v1003
  %v1005 = vpack.c.bf16 %v937, %v937
  %1007 = vrot.lane.b32.xlu0 %v1005, 64
  %v1008 = vpop.permute.xlu0 %1007
  %v1010 = vsel %vm178, %v1008, 0
  %1012 = vmatprep.subr.bf16.mxu0 0
  %1013 = vmatpush1.bf16.msra.mxu0 %v256
  %1014 = vmatprep.subr.bf16.mxu0 0
  %1015 = vmatpush1.bf16.msra.mxu0 %v257
  %1016 = vmatprep.subr.bf16.mxu0 0
  %1017 = vmatpush1.bf16.msra.mxu0 0
  %1018 = vmatprep.subr.bf16.mxu0 0
  %1019 = vmatpush1.bf16.msra.mxu0 0
  %1020 = vmatprep.subr.bf16.mxu0 0
  %1021 = vmatpush1.bf16.msra.mxu0 0
  %1022 = vmatprep.subr.bf16.mxu0 0
  %1023 = vmatpush1.bf16.msra.mxu0 0
  %1024 = vmatprep.subr.bf16.mxu0 0
  %1025 = vmatpush1.bf16.msra.mxu0 0
  %1026 = vmatprep.subr.bf16.mxu0 0
  %1027 = vmatpush1.bf16.msra.mxu0 0
  %1028 = vmatprep.subr.bf16.mxu0 0
  %1029 = vmatpush1.bf16.msra.mxu0 0
  %1030 = vmatprep.subr.bf16.mxu0 0
  %1031 = vmatpush1.bf16.msra.mxu0 0
  %1032 = vmatprep.subr.bf16.mxu0 0
  %1033 = vmatpush1.bf16.msra.mxu0 0
  %1034 = vmatprep.subr.bf16.mxu0 0
  %1035 = vmatpush1.bf16.msra.mxu0 0
  %1036 = vmatprep.subr.bf16.mxu0 0
  %1037 = vmatpush1.bf16.msra.mxu0 0
  %1038 = vmatprep.subr.bf16.mxu0 0
  %1039 = vmatpush1.bf16.msra.mxu0 0
  %1040 = vmatprep.subr.bf16.mxu0 0
  %1041 = vmatpush1.bf16.msra.mxu0 0
  %1042 = vmatprep.subr.bf16.mxu0 0
  %1043 = vmatpush1.bf16.msra.mxu0 0
  %1044 = vmatprep.mubr.bf16.mxu0 0
  %1045 = vmatmul.mubr.bf16.gmra.mrb[0].mxu0 %v1010
  %v1046 = vpop.f32.mrb[0].mxu0
  %v1047 = vadd.f32 0.0, %v1046
  %v1048 = vpop.f32.mrb[0].mxu0
  %v1049 = vpop.f32.mrb[0].mxu0
  %v1050 = vpop.f32.mrb[0].mxu0
  %1051 = vdwg.mxu0
  %1053 = vrot.lane.b32.xlu0 %v1004, 64
  %v1054 = vpop.permute.xlu0 %1053
  %v1056 = vsel %vm178, %v1054, 0
  %1058 = vmatprep.subr.bf16.mxu0 0
  %1059 = vmatpush1.bf16.msra.mxu0 %v311
  %1060 = vmatprep.subr.bf16.mxu0 0
  %1061 = vmatpush1.bf16.msra.mxu0 %v312
  %1062 = vmatprep.subr.bf16.mxu0 0
  %1063 = vmatpush1.bf16.msra.mxu0 0
  %1064 = vmatprep.subr.bf16.mxu0 0
  %1065 = vmatpush1.bf16.msra.mxu0 0
  %1066 = vmatprep.subr.bf16.mxu0 0
  %1067 = vmatpush1.bf16.msra.mxu0 0
  %1068 = vmatprep.subr.bf16.mxu0 0
  %1069 = vmatpush1.bf16.msra.mxu0 0
  %1070 = vmatprep.subr.bf16.mxu0 0
  %1071 = vmatpush1.bf16.msra.mxu0 0
  %1072 = vmatprep.subr.bf16.mxu0 0
  %1073 = vmatpush1.bf16.msra.mxu0 0
  %1074 = vmatprep.subr.bf16.mxu0 0
  %1075 = vmatpush1.bf16.msra.mxu0 0
  %1076 = vmatprep.subr.bf16.mxu0 0
  %1077 = vmatpush1.bf16.msra.mxu0 0
  %1078 = vmatprep.subr.bf16.mxu0 0
  %1079 = vmatpush1.bf16.msra.mxu0 0
  %1080 = vmatprep.subr.bf16.mxu0 0
  %1081 = vmatpush1.bf16.msra.mxu0 0
  %1082 = vmatprep.subr.bf16.mxu0 0
  %1083 = vmatpush1.bf16.msra.mxu0 0
  %1084 = vmatprep.subr.bf16.mxu0 0
  %1085 = vmatpush1.bf16.msra.mxu0 0
  %1086 = vmatprep.subr.bf16.mxu0 0
  %1087 = vmatpush1.bf16.msra.mxu0 0
  %1088 = vmatprep.subr.bf16.mxu0 0
  %1089 = vmatpush1.bf16.msra.mxu0 0
  %1090 = vmatprep.mubr.bf16.mxu0 0
  %1091 = vmatmul.mubr.bf16.gmra.mrb[0].mxu0 %v1056
  %v1092 = vpop.f32.mrb[0].mxu0
  %v1093 = vadd.f32 %v1047, %v1092
  %v1094 = vpop.f32.mrb[0].mxu0
  %v1095 = vpop.f32.mrb[0].mxu0
  %v1096 = vpop.f32.mrb[0].mxu0
  %1097 = vdwg.mxu0
  %v1098 = vadd.f32 %v1093, %v39
  %v1099 = vxor.u32 %v1098, 2147483648
  %v1100 = vmul.f32 %v1099, 1.442695
  %v1101 = vpow.pop %v1100
  %v1102 = vadd.f32 %v1101, 1.0
  %v1103 = vrcp.pop %v1102
  %v1104 = vmul.f32 1.0, %v1103
  %v1105 = vtanh.pop %v1098
  %v1106 = vmul.f32 %v1104, %v931
  %1108 = vrot.lane.b32.xlu0 %v1105, 32
  %v1109 = vpop.permute.xlu0 %1108
  %v1111 = vmul.f32 %v1104, %v1109
  %1113 = vrot.lane.b32.xlu0 %v1111, 32
  %v1114 = vpop.permute.xlu0 %1113
  %v1116 = vadd.f32 %v1106, %v1114
  %v1117 = vtanh.pop %v1116
  %1119 = vrot.lane.b32.xlu0 %v1117, 32
  %v1120 = vpop.permute.xlu0 %1119
  %v1122 = vmul.f32 %v1104, %v1120
  %v1123 = vld [vmem:[#allocation2 + $0x28] sm:$0xff]
  %1124 = vmatprep.subr.bf16.mxu0 0
  %1125 = vmatpush1.bf16.msra.mxu0 %v174
  %1126 = vmatprep.subr.bf16.mxu0 0
  %1127 = vmatpush1.bf16.msra.mxu0 %v175
  %1128 = vmatprep.subr.bf16.mxu0 0
  %1129 = vmatpush1.bf16.msra.mxu0 0
  %1130 = vmatprep.subr.bf16.mxu0 0
  %1131 = vmatpush1.bf16.msra.mxu0 0
  %1132 = vmatprep.subr.bf16.mxu0 0
  %1133 = vmatpush1.bf16.msra.mxu0 0
  %1134 = vmatprep.subr.bf16.mxu0 0
  %1135 = vmatpush1.bf16.msra.mxu0 0
  %1136 = vmatprep.subr.bf16.mxu0 0
  %1137 = vmatpush1.bf16.msra.mxu0 0
  %1138 = vmatprep.subr.bf16.mxu0 0
  %1139 = vmatpush1.bf16.msra.mxu0 0
  %1140 = vmatprep.subr.bf16.mxu0 0
  %1141 = vmatpush1.bf16.msra.mxu0 0
  %1142 = vmatprep.subr.bf16.mxu0 0
  %1143 = vmatpush1.bf16.msra.mxu0 0
  %1144 = vmatprep.subr.bf16.mxu0 0
  %1145 = vmatpush1.bf16.msra.mxu0 0
  %1146 = vmatprep.subr.bf16.mxu0 0
  %1147 = vmatpush1.bf16.msra.mxu0 0
  %1148 = vmatprep.subr.bf16.mxu0 0
  %1149 = vmatpush1.bf16.msra.mxu0 0
  %1150 = vmatprep.subr.bf16.mxu0 0
  %1151 = vmatpush1.bf16.msra.mxu0 0
  %1152 = vmatprep.subr.bf16.mxu0 0
  %1153 = vmatpush1.bf16.msra.mxu0 0
  %1154 = vmatprep.subr.bf16.mxu0 0
  %1155 = vmatpush1.bf16.msra.mxu0 0
  %1156 = vmatprep.mubr.bf16.mxu0 0
  %1157 = vmatmul.mubr.bf16.gmra.mrb[0].mxu0 %v1056
  %v1158 = vpop.f32.mrb[0].mxu0
  %v1159 = vadd.f32 0.0, %v1158
  %v1160 = vpop.f32.mrb[0].mxu0
  %v1161 = vpop.f32.mrb[0].mxu0
  %v1162 = vpop.f32.mrb[0].mxu0
  %1163 = vdwg.mxu0
  %v1164 = vadd.f32 %v1123, %v1159
  %v1165 = vxor.u32 %v1164, 2147483648
  %v1166 = vmul.f32 %v1165, 1.442695
  %v1167 = vpow.pop %v1166
  %v1168 = vadd.f32 %v1167, 1.0
  %v1169 = vrcp.pop %v1168
  %v1170 = vmul.f32 1.0, %v1169
  %v1171 = vtanh.pop %v1164
  %v1172 = vmul.f32 %v1170, %v997
  %1174 = vrot.lane.b32.xlu0 %v1171, 32
  %v1175 = vpop.permute.xlu0 %1174
  %v1177 = vmul.f32 %v1170, %v1175
  %1179 = vrot.lane.b32.xlu0 %v1177, 32
  %v1180 = vpop.permute.xlu0 %1179
  %v1182 = vadd.f32 %v1172, %v1180
  %v1183 = vtanh.pop %v1182
  %1185 = vrot.lane.b32.xlu0 %v1183, 32
  %v1186 = vpop.permute.xlu0 %1185
  %v1188 = vmul.f32 %v1170, %v1186
  %v1189 = vpack.c.bf16 %v1188, %v1188
  %v1190 = vpack.c.bf16 %v1122, %v1122
  %1192 = vrot.lane.b32.xlu0 %v1190, 64
  %v1193 = vpop.permute.xlu0 %1192
  %v1195 = vsel %vm178, %v1193, 0
  %1197 = vmatprep.subr.bf16.mxu0 0
  %1198 = vmatpush1.bf16.msra.mxu0 %v256
  %1199 = vmatprep.subr.bf16.mxu0 0
  %1200 = vmatpush1.bf16.msra.mxu0 %v257
  %1201 = vmatprep.subr.bf16.mxu0 0
  %1202 = vmatpush1.bf16.msra.mxu0 0
  %1203 = vmatprep.subr.bf16.mxu0 0
  %1204 = vmatpush1.bf16.msra.mxu0 0
  %1205 = vmatprep.subr.bf16.mxu0 0
  %1206 = vmatpush1.bf16.msra.mxu0 0
  %1207 = vmatprep.subr.bf16.mxu0 0
  %1208 = vmatpush1.bf16.msra.mxu0 0
  %1209 = vmatprep.subr.bf16.mxu0 0
  %1210 = vmatpush1.bf16.msra.mxu0 0
  %1211 = vmatprep.subr.bf16.mxu0 0
  %1212 = vmatpush1.bf16.msra.mxu0 0
  %1213 = vmatprep.subr.bf16.mxu0 0
  %1214 = vmatpush1.bf16.msra.mxu0 0
  %1215 = vmatprep.subr.bf16.mxu0 0
  %1216 = vmatpush1.bf16.msra.mxu0 0
  %1217 = vmatprep.subr.bf16.mxu0 0
  %1218 = vmatpush1.bf16.msra.mxu0 0
  %1219 = vmatprep.subr.bf16.mxu0 0
  %1220 = vmatpush1.bf16.msra.mxu0 0
  %1221 = vmatprep.subr.bf16.mxu0 0
  %1222 = vmatpush1.bf16.msra.mxu0 0
  %1223 = vmatprep.subr.bf16.mxu0 0
  %1224 = vmatpush1.bf16.msra.mxu0 0
  %1225 = vmatprep.subr.bf16.mxu0 0
  %1226 = vmatpush1.bf16.msra.mxu0 0
  %1227 = vmatprep.subr.bf16.mxu0 0
  %1228 = vmatpush1.bf16.msra.mxu0 0
  %1229 = vmatprep.mubr.bf16.mxu0 0
  %1230 = vmatmul.mubr.bf16.gmra.mrb[0].mxu0 %v1195
  %v1231 = vpop.f32.mrb[0].mxu0
  %v1232 = vadd.f32 0.0, %v1231
  %v1233 = vpop.f32.mrb[0].mxu0
  %v1234 = vpop.f32.mrb[0].mxu0
  %v1235 = vpop.f32.mrb[0].mxu0
  %1236 = vdwg.mxu0
  %1238 = vrot.lane.b32.xlu0 %v1189, 64
  %v1239 = vpop.permute.xlu0 %1238
  %v1241 = vsel %vm178, %v1239, 0
  %1243 = vmatprep.subr.bf16.mxu0 0
  %1244 = vmatpush1.bf16.msra.mxu0 %v311
  %1245 = vmatprep.subr.bf16.mxu0 0
  %1246 = vmatpush1.bf16.msra.mxu0 %v312
  %1247 = vmatprep.subr.bf16.mxu0 0
  %1248 = vmatpush1.bf16.msra.mxu0 0
  %1249 = vmatprep.subr.bf16.mxu0 0
  %1250 = vmatpush1.bf16.msra.mxu0 0
  %1251 = vmatprep.subr.bf16.mxu0 0
  %1252 = vmatpush1.bf16.msra.mxu0 0
  %1253 = vmatprep.subr.bf16.mxu0 0
  %1254 = vmatpush1.bf16.msra.mxu0 0
  %1255 = vmatprep.subr.bf16.mxu0 0
  %1256 = vmatpush1.bf16.msra.mxu0 0
  %1257 = vmatprep.subr.bf16.mxu0 0
  %1258 = vmatpush1.bf16.msra.mxu0 0
  %1259 = vmatprep.subr.bf16.mxu0 0
  %1260 = vmatpush1.bf16.msra.mxu0 0
  %1261 = vmatprep.subr.bf16.mxu0 0
  %1262 = vmatpush1.bf16.msra.mxu0 0
  %1263 = vmatprep.subr.bf16.mxu0 0
  %1264 = vmatpush1.bf16.msra.mxu0 0
  %1265 = vmatprep.subr.bf16.mxu0 0
  %1266 = vmatpush1.bf16.msra.mxu0 0
  %1267 = vmatprep.subr.bf16.mxu0 0
  %1268 = vmatpush1.bf16.msra.mxu0 0
  %1269 = vmatprep.subr.bf16.mxu0 0
  %1270 = vmatpush1.bf16.msra.mxu0 0
  %1271 = vmatprep.subr.bf16.mxu0 0
  %1272 = vmatpush1.bf16.msra.mxu0 0
  %1273 = vmatprep.subr.bf16.mxu0 0
  %1274 = vmatpush1.bf16.msra.mxu0 0
  %1275 = vmatprep.mubr.bf16.mxu0 0
  %1276 = vmatmul.mubr.bf16.gmra.mrb[0].mxu0 %v1241
  %v1277 = vpop.f32.mrb[0].mxu0
  %v1278 = vadd.f32 %v1232, %v1277
  %v1279 = vpop.f32.mrb[0].mxu0
  %v1280 = vpop.f32.mrb[0].mxu0
  %v1281 = vpop.f32.mrb[0].mxu0
  %1282 = vdwg.mxu0
  %v1283 = vadd.f32 %v1278, %v39
  %v1284 = vxor.u32 %v1283, 2147483648
  %v1285 = vmul.f32 %v1284, 1.442695
  %v1286 = vpow.pop %v1285
  %v1287 = vadd.f32 %v1286, 1.0
  %v1288 = vrcp.pop %v1287
  %v1289 = vmul.f32 1.0, %v1288
  %v1290 = vtanh.pop %v1283
  %v1291 = vmul.f32 %v1289, %v1116
  %1293 = vrot.lane.b32.xlu0 %v1290, 32
  %v1294 = vpop.permute.xlu0 %1293
  %v1296 = vmul.f32 %v1289, %v1294
  %1298 = vrot.lane.b32.xlu0 %v1296, 32
  %v1299 = vpop.permute.xlu0 %1298
  %v1301 = vadd.f32 %v1291, %v1299
  %v1302 = vtanh.pop %v1301
  %1304 = vrot.lane.b32.xlu0 %v1302, 32
  %v1305 = vpop.permute.xlu0 %1304
  %v1307 = vmul.f32 %v1289, %v1305
  %v1308 = vld [vmem:[#allocation2 + $0x30] sm:$0xff]
  %1309 = vmatprep.subr.bf16.mxu0 0
  %1310 = vmatpush1.bf16.msra.mxu0 %v174
  %1311 = vmatprep.subr.bf16.mxu0 0
  %1312 = vmatpush1.bf16.msra.mxu0 %v175
  %1313 = vmatprep.subr.bf16.mxu0 0
  %1314 = vmatpush1.bf16.msra.mxu0 0
  %1315 = vmatprep.subr.bf16.mxu0 0
  %1316 = vmatpush1.bf16.msra.mxu0 0
  %1317 = vmatprep.subr.bf16.mxu0 0
  %1318 = vmatpush1.bf16.msra.mxu0 0
  %1319 = vmatprep.subr.bf16.mxu0 0
  %1320 = vmatpush1.bf16.msra.mxu0 0
  %1321 = vmatprep.subr.bf16.mxu0 0
  %1322 = vmatpush1.bf16.msra.mxu0 0
  %1323 = vmatprep.subr.bf16.mxu0 0
  %1324 = vmatpush1.bf16.msra.mxu0 0
  %1325 = vmatprep.subr.bf16.mxu0 0
  %1326 = vmatpush1.bf16.msra.mxu0 0
  %1327 = vmatprep.subr.bf16.mxu0 0
  %1328 = vmatpush1.bf16.msra.mxu0 0
  %1329 = vmatprep.subr.bf16.mxu0 0
  %1330 = vmatpush1.bf16.msra.mxu0 0
  %1331 = vmatprep.subr.bf16.mxu0 0
  %1332 = vmatpush1.bf16.msra.mxu0 0
  %1333 = vmatprep.subr.bf16.mxu0 0
  %1334 = vmatpush1.bf16.msra.mxu0 0
  %1335 = vmatprep.subr.bf16.mxu0 0
  %1336 = vmatpush1.bf16.msra.mxu0 0
  %1337 = vmatprep.subr.bf16.mxu0 0
  %1338 = vmatpush1.bf16.msra.mxu0 0
  %1339 = vmatprep.subr.bf16.mxu0 0
  %1340 = vmatpush1.bf16.msra.mxu0 0
  %1341 = vmatprep.mubr.bf16.mxu0 0
  %1342 = vmatmul.mubr.bf16.gmra.mrb[0].mxu0 %v1241
  %v1343 = vpop.f32.mrb[0].mxu0
  %v1344 = vadd.f32 0.0, %v1343
  %v1345 = vpop.f32.mrb[0].mxu0
  %v1346 = vpop.f32.mrb[0].mxu0
  %v1347 = vpop.f32.mrb[0].mxu0
  %1348 = vdwg.mxu0
  %v1349 = vadd.f32 %v1308, %v1344
  %v1350 = vxor.u32 %v1349, 2147483648
  %v1351 = vmul.f32 %v1350, 1.442695
  %v1352 = vpow.pop %v1351
  %v1353 = vadd.f32 %v1352, 1.0
  %v1354 = vrcp.pop %v1353
  %v1355 = vmul.f32 1.0, %v1354
  %v1356 = vtanh.pop %v1349
  %v1357 = vmul.f32 %v1355, %v1182
  %1359 = vrot.lane.b32.xlu0 %v1356, 32
  %v1360 = vpop.permute.xlu0 %1359
  %v1362 = vmul.f32 %v1355, %v1360
  %1364 = vrot.lane.b32.xlu0 %v1362, 32
  %v1365 = vpop.permute.xlu0 %1364
  %v1367 = vadd.f32 %v1357, %v1365
  %v1368 = vtanh.pop %v1367
  %1370 = vrot.lane.b32.xlu0 %v1368, 32
  %v1371 = vpop.permute.xlu0 %1370
  %v1373 = vmul.f32 %v1355, %v1371
  %v1374 = vpack.c.bf16 %v1373, %v1373
  %v1375 = vpack.c.bf16 %v1307, %v1307
  %1377 = vrot.lane.b32.xlu0 %v1375, 64
  %v1378 = vpop.permute.xlu0 %1377
  %v1380 = vsel %vm178, %v1378, 0
  %1382 = vmatprep.subr.bf16.mxu0 0
  %1383 = vmatpush1.bf16.msra.mxu0 %v256
  %1384 = vmatprep.subr.bf16.mxu0 0
  %1385 = vmatpush1.bf16.msra.mxu0 %v257
  %1386 = vmatprep.subr.bf16.mxu0 0
  %1387 = vmatpush1.bf16.msra.mxu0 0
  %1388 = vmatprep.subr.bf16.mxu0 0
  %1389 = vmatpush1.bf16.msra.mxu0 0
  %1390 = vmatprep.subr.bf16.mxu0 0
  %1391 = vmatpush1.bf16.msra.mxu0 0
  %1392 = vmatprep.subr.bf16.mxu0 0
  %1393 = vmatpush1.bf16.msra.mxu0 0
  %1394 = vmatprep.subr.bf16.mxu0 0
  %1395 = vmatpush1.bf16.msra.mxu0 0
  %1396 = vmatprep.subr.bf16.mxu0 0
  %1397 = vmatpush1.bf16.msra.mxu0 0
  %1398 = vmatprep.subr.bf16.mxu0 0
  %1399 = vmatpush1.bf16.msra.mxu0 0
  %1400 = vmatprep.subr.bf16.mxu0 0
  %1401 = vmatpush1.bf16.msra.mxu0 0
  %1402 = vmatprep.subr.bf16.mxu0 0
  %1403 = vmatpush1.bf16.msra.mxu0 0
  %1404 = vmatprep.subr.bf16.mxu0 0
  %1405 = vmatpush1.bf16.msra.mxu0 0
  %1406 = vmatprep.subr.bf16.mxu0 0
  %1407 = vmatpush1.bf16.msra.mxu0 0
  %1408 = vmatprep.subr.bf16.mxu0 0
  %1409 = vmatpush1.bf16.msra.mxu0 0
  %1410 = vmatprep.subr.bf16.mxu0 0
  %1411 = vmatpush1.bf16.msra.mxu0 0
  %1412 = vmatprep.subr.bf16.mxu0 0
  %1413 = vmatpush1.bf16.msra.mxu0 0
  %1414 = vmatprep.mubr.bf16.mxu0 0
  %1415 = vmatmul.mubr.bf16.gmra.mrb[0].mxu0 %v1380
  %v1416 = vpop.f32.mrb[0].mxu0
  %v1417 = vadd.f32 0.0, %v1416
  %v1418 = vpop.f32.mrb[0].mxu0
  %v1419 = vpop.f32.mrb[0].mxu0
  %v1420 = vpop.f32.mrb[0].mxu0
  %1421 = vdwg.mxu0
  %1423 = vrot.lane.b32.xlu0 %v1374, 64
  %v1424 = vpop.permute.xlu0 %1423
  %v1426 = vsel %vm178, %v1424, 0
  %1428 = vmatprep.subr.bf16.mxu0 0
  %1429 = vmatpush1.bf16.msra.mxu0 %v311
  %1430 = vmatprep.subr.bf16.mxu0 0
  %1431 = vmatpush1.bf16.msra.mxu0 %v312
  %1432 = vmatprep.subr.bf16.mxu0 0
  %1433 = vmatpush1.bf16.msra.mxu0 0
  %1434 = vmatprep.subr.bf16.mxu0 0
  %1435 = vmatpush1.bf16.msra.mxu0 0
  %1436 = vmatprep.subr.bf16.mxu0 0
  %1437 = vmatpush1.bf16.msra.mxu0 0
  %1438 = vmatprep.subr.bf16.mxu0 0
  %1439 = vmatpush1.bf16.msra.mxu0 0
  %1440 = vmatprep.subr.bf16.mxu0 0
  %1441 = vmatpush1.bf16.msra.mxu0 0
  %1442 = vmatprep.subr.bf16.mxu0 0
  %1443 = vmatpush1.bf16.msra.mxu0 0
  %1444 = vmatprep.subr.bf16.mxu0 0
  %1445 = vmatpush1.bf16.msra.mxu0 0
  %1446 = vmatprep.subr.bf16.mxu0 0
  %1447 = vmatpush1.bf16.msra.mxu0 0
  %1448 = vmatprep.subr.bf16.mxu0 0
  %1449 = vmatpush1.bf16.msra.mxu0 0
  %1450 = vmatprep.subr.bf16.mxu0 0
  %1451 = vmatpush1.bf16.msra.mxu0 0
  %1452 = vmatprep.subr.bf16.mxu0 0
  %1453 = vmatpush1.bf16.msra.mxu0 0
  %1454 = vmatprep.subr.bf16.mxu0 0
  %1455 = vmatpush1.bf16.msra.mxu0 0
  %1456 = vmatprep.subr.bf16.mxu0 0
  %1457 = vmatpush1.bf16.msra.mxu0 0
  %1458 = vmatprep.subr.bf16.mxu0 0
  %1459 = vmatpush1.bf16.msra.mxu0 0
  %1460 = vmatprep.mubr.bf16.mxu0 0
  %1461 = vmatmul.mubr.bf16.gmra.mrb[0].mxu0 %v1426
  %v1462 = vpop.f32.mrb[0].mxu0
  %v1463 = vadd.f32 %v1417, %v1462
  %v1464 = vpop.f32.mrb[0].mxu0
  %v1465 = vpop.f32.mrb[0].mxu0
  %v1466 = vpop.f32.mrb[0].mxu0
  %1467 = vdwg.mxu0
  %v1468 = vadd.f32 %v1463, %v39
  %v1469 = vxor.u32 %v1468, 2147483648
  %v1470 = vmul.f32 %v1469, 1.442695
  %v1471 = vpow.pop %v1470
  %v1472 = vadd.f32 %v1471, 1.0
  %v1473 = vrcp.pop %v1472
  %v1474 = vmul.f32 1.0, %v1473
  %v1475 = vtanh.pop %v1468
  %v1476 = vmul.f32 %v1474, %v1301
  %1478 = vrot.lane.b32.xlu0 %v1475, 32
  %v1479 = vpop.permute.xlu0 %1478
  %v1481 = vmul.f32 %v1474, %v1479
  %1483 = vrot.lane.b32.xlu0 %v1481, 32
  %v1484 = vpop.permute.xlu0 %1483
  %v1486 = vadd.f32 %v1476, %v1484
  %v1487 = vtanh.pop %v1486
  %1489 = vrot.lane.b32.xlu0 %v1487, 32
  %v1490 = vpop.permute.xlu0 %1489
  %v1492 = vmul.f32 %v1474, %v1490
  %v1493 = vld [vmem:[#allocation2 + $0x38] sm:$0xff]
  %1494 = vmatprep.subr.bf16.mxu0 0
  %1495 = vmatpush1.bf16.msra.mxu0 %v174
  %1496 = vmatprep.subr.bf16.mxu0 0
  %1497 = vmatpush1.bf16.msra.mxu0 %v175
  %1498 = vmatprep.subr.bf16.mxu0 0
  %1499 = vmatpush1.bf16.msra.mxu0 0
  %1500 = vmatprep.subr.bf16.mxu0 0
  %1501 = vmatpush1.bf16.msra.mxu0 0
  %1502 = vmatprep.subr.bf16.mxu0 0
  %1503 = vmatpush1.bf16.msra.mxu0 0
  %1504 = vmatprep.subr.bf16.mxu0 0
  %1505 = vmatpush1.bf16.msra.mxu0 0
  %1506 = vmatprep.subr.bf16.mxu0 0
  %1507 = vmatpush1.bf16.msra.mxu0 0
  %1508 = vmatprep.subr.bf16.mxu0 0
  %1509 = vmatpush1.bf16.msra.mxu0 0
  %1510 = vmatprep.subr.bf16.mxu0 0
  %1511 = vmatpush1.bf16.msra.mxu0 0
  %1512 = vmatprep.subr.bf16.mxu0 0
  %1513 = vmatpush1.bf16.msra.mxu0 0
  %1514 = vmatprep.subr.bf16.mxu0 0
  %1515 = vmatpush1.bf16.msra.mxu0 0
  %1516 = vmatprep.subr.bf16.mxu0 0
  %1517 = vmatpush1.bf16.msra.mxu0 0
  %1518 = vmatprep.subr.bf16.mxu0 0
  %1519 = vmatpush1.bf16.msra.mxu0 0
  %1520 = vmatprep.subr.bf16.mxu0 0
  %1521 = vmatpush1.bf16.msra.mxu0 0
  %1522 = vmatprep.subr.bf16.mxu0 0
  %1523 = vmatpush1.bf16.msra.mxu0 0
  %1524 = vmatprep.subr.bf16.mxu0 0
  %1525 = vmatpush1.bf16.msra.mxu0 0
  %1526 = vmatprep.mubr.bf16.mxu0 0
  %1527 = vmatmul.mubr.bf16.gmra.mrb[0].mxu0 %v1426
  %v1528 = vpop.f32.mrb[0].mxu0
  %v1529 = vadd.f32 0.0, %v1528
  %v1530 = vpop.f32.mrb[0].mxu0
  %v1531 = vpop.f32.mrb[0].mxu0
  %v1532 = vpop.f32.mrb[0].mxu0
  %1533 = vdwg.mxu0
  %v1534 = vadd.f32 %v1493, %v1529
  %v1535 = vxor.u32 %v1534, 2147483648
  %v1536 = vmul.f32 %v1535, 1.442695
  %v1537 = vpow.pop %v1536
  %v1538 = vadd.f32 %v1537, 1.0
  %v1539 = vrcp.pop %v1538
  %v1540 = vmul.f32 1.0, %v1539
  %v1541 = vtanh.pop %v1534
  %v1542 = vmul.f32 %v1540, %v1367
  %1544 = vrot.lane.b32.xlu0 %v1541, 32
  %v1545 = vpop.permute.xlu0 %1544
  %v1547 = vmul.f32 %v1540, %v1545
  %1549 = vrot.lane.b32.xlu0 %v1547, 32
  %v1550 = vpop.permute.xlu0 %1549
  %v1552 = vadd.f32 %v1542, %v1550
  %v1553 = vtanh.pop %v1552
  %1555 = vrot.lane.b32.xlu0 %v1553, 32
  %v1556 = vpop.permute.xlu0 %1555
  %v1558 = vmul.f32 %v1540, %v1556
  %v1559 = vpack.c.bf16 %v1558, %v1558
  %v1560 = vpack.c.bf16 %v1492, %v1492
  %1562 = vrot.lane.b32.xlu0 %v1560, 64
  %v1563 = vpop.permute.xlu0 %1562
  %v1565 = vsel %vm178, %v1563, 0
  %1567 = vmatprep.subr.bf16.mxu0 0
  %1568 = vmatpush1.bf16.msra.mxu0 %v256
  %1569 = vmatprep.subr.bf16.mxu0 0
  %1570 = vmatpush1.bf16.msra.mxu0 %v257
  %1571 = vmatprep.subr.bf16.mxu0 0
  %1572 = vmatpush1.bf16.msra.mxu0 0
  %1573 = vmatprep.subr.bf16.mxu0 0
  %1574 = vmatpush1.bf16.msra.mxu0 0
  %1575 = vmatprep.subr.bf16.mxu0 0
  %1576 = vmatpush1.bf16.msra.mxu0 0
  %1577 = vmatprep.subr.bf16.mxu0 0
  %1578 = vmatpush1.bf16.msra.mxu0 0
  %1579 = vmatprep.subr.bf16.mxu0 0
  %1580 = vmatpush1.bf16.msra.mxu0 0
  %1581 = vmatprep.subr.bf16.mxu0 0
  %1582 = vmatpush1.bf16.msra.mxu0 0
  %1583 = vmatprep.subr.bf16.mxu0 0
  %1584 = vmatpush1.bf16.msra.mxu0 0
  %1585 = vmatprep.subr.bf16.mxu0 0
  %1586 = vmatpush1.bf16.msra.mxu0 0
  %1587 = vmatprep.subr.bf16.mxu0 0
  %1588 = vmatpush1.bf16.msra.mxu0 0
  %1589 = vmatprep.subr.bf16.mxu0 0
  %1590 = vmatpush1.bf16.msra.mxu0 0
  %1591 = vmatprep.subr.bf16.mxu0 0
  %1592 = vmatpush1.bf16.msra.mxu0 0
  %1593 = vmatprep.subr.bf16.mxu0 0
  %1594 = vmatpush1.bf16.msra.mxu0 0
  %1595 = vmatprep.subr.bf16.mxu0 0
  %1596 = vmatpush1.bf16.msra.mxu0 0
  %1597 = vmatprep.subr.bf16.mxu0 0
  %1598 = vmatpush1.bf16.msra.mxu0 0
  %1599 = vmatprep.mubr.bf16.mxu0 0
  %1600 = vmatmul.mubr.bf16.gmra.mrb[0].mxu0 %v1565
  %v1601 = vpop.f32.mrb[0].mxu0
  %v1602 = vadd.f32 0.0, %v1601
  %v1603 = vpop.f32.mrb[0].mxu0
  %v1604 = vpop.f32.mrb[0].mxu0
  %v1605 = vpop.f32.mrb[0].mxu0
  %1606 = vdwg.mxu0
  %1608 = vrot.lane.b32.xlu0 %v1559, 64
  %v1609 = vpop.permute.xlu0 %1608
  %v1611 = vsel %vm178, %v1609, 0
  %1613 = vmatprep.subr.bf16.mxu0 0
  %1614 = vmatpush1.bf16.msra.mxu0 %v311
  %1615 = vmatprep.subr.bf16.mxu0 0
  %1616 = vmatpush1.bf16.msra.mxu0 %v312
  %1617 = vmatprep.subr.bf16.mxu0 0
  %1618 = vmatpush1.bf16.msra.mxu0 0
  %1619 = vmatprep.subr.bf16.mxu0 0
  %1620 = vmatpush1.bf16.msra.mxu0 0
  %1621 = vmatprep.subr.bf16.mxu0 0
  %1622 = vmatpush1.bf16.msra.mxu0 0
  %1623 = vmatprep.subr.bf16.mxu0 0
  %1624 = vmatpush1.bf16.msra.mxu0 0
  %1625 = vmatprep.subr.bf16.mxu0 0
  %1626 = vmatpush1.bf16.msra.mxu0 0
  %1627 = vmatprep.subr.bf16.mxu0 0
  %1628 = vmatpush1.bf16.msra.mxu0 0
  %1629 = vmatprep.subr.bf16.mxu0 0
  %1630 = vmatpush1.bf16.msra.mxu0 0
  %1631 = vmatprep.subr.bf16.mxu0 0
  %1632 = vmatpush1.bf16.msra.mxu0 0
  %1633 = vmatprep.subr.bf16.mxu0 0
  %1634 = vmatpush1.bf16.msra.mxu0 0
  %1635 = vmatprep.subr.bf16.mxu0 0
  %1636 = vmatpush1.bf16.msra.mxu0 0
  %1637 = vmatprep.subr.bf16.mxu0 0
  %1638 = vmatpush1.bf16.msra.mxu0 0
  %1639 = vmatprep.subr.bf16.mxu0 0
  %1640 = vmatpush1.bf16.msra.mxu0 0
  %1641 = vmatprep.subr.bf16.mxu0 0
  %1642 = vmatpush1.bf16.msra.mxu0 0
  %1643 = vmatprep.subr.bf16.mxu0 0
  %1644 = vmatpush1.bf16.msra.mxu0 0
  %1645 = vmatprep.mubr.bf16.mxu0 0
  %1646 = vmatmul.mubr.bf16.gmra.mrb[0].mxu0 %v1611
  %v1647 = vpop.f32.mrb[0].mxu0
  %v1648 = vadd.f32 %v1602, %v1647
  %v1649 = vpop.f32.mrb[0].mxu0
  %v1650 = vpop.f32.mrb[0].mxu0
  %v1651 = vpop.f32.mrb[0].mxu0
  %1652 = vdwg.mxu0
  %v1653 = vadd.f32 %v1648, %v39
  %v1654 = vxor.u32 %v1653, 2147483648
  %v1655 = vmul.f32 %v1654, 1.442695
  %v1656 = vpow.pop %v1655
  %v1657 = vadd.f32 %v1656, 1.0
  %v1658 = vrcp.pop %v1657
  %v1659 = vmul.f32 1.0, %v1658
  %v1660 = vtanh.pop %v1653
  %v1661 = vmul.f32 %v1659, %v1486
  %1663 = vrot.lane.b32.xlu0 %v1660, 32
  %v1664 = vpop.permute.xlu0 %1663
  %v1666 = vmul.f32 %v1659, %v1664
  %1668 = vrot.lane.b32.xlu0 %v1666, 32
  %v1669 = vpop.permute.xlu0 %1668
  %v1671 = vadd.f32 %v1661, %v1669
  %v1672 = vtanh.pop %v1671
  %1674 = vrot.lane.b32.xlu0 %v1672, 32
  %v1675 = vpop.permute.xlu0 %1674
  %v1677 = vmul.f32 %v1659, %v1675
  %v1678 = vld [vmem:[%s3] sm:$0xff]
  %v1679 = vld [vmem:[%s3 + $0x8] sm:$0xff]
  %v1680 = vld [vmem:[%s3 + $0x10] sm:$0xff]
  %v1681 = vld [vmem:[%s3 + $0x18] sm:$0xff]
  %v1682 = vld [vmem:[%s4] sm:$0x1]
  %v1684 = vlaneseq
  %v1685 = vshrl.u32 %v1684, 7
  %v1686 = vsub.s32 0, %v1685
  %v1687 = vrot.slane %v1682, %v1686
  %1690 = vrot.lane.b32.xlu0 %v1677, 64
  %v1691 = vpop.permute.xlu0 %1690
  %v1692 = vsel %vm178, %v1691, 0
  %1694 = vmatprep.subr.mxu0 0.0
  %1695 = vmatpush1.msra.mxu0 %v1678
  %1696 = vmatprep.subr.mxu0 0.0
  %1697 = vmatpush1.msra.mxu0 %v1679
  %1698 = vmatprep.subr.mxu0 0.0
  %1699 = vmatpush1.msra.mxu0 %v1680
  %1700 = vmatprep.subr.mxu0 0.0
  %1701 = vmatpush1.msra.mxu0 %v1681
  %1702 = vmatprep.subr.mxu0 0.0
  %1703 = vmatpush1.msra.mxu0 0.0
  %1704 = vmatprep.subr.mxu0 0.0
  %1705 = vmatpush1.msra.mxu0 0.0
  %1706 = vmatprep.subr.mxu0 0.0
  %1707 = vmatpush1.msra.mxu0 0.0
  %1708 = vmatprep.subr.mxu0 0.0
  %1709 = vmatpush1.msra.mxu0 0.0
  %1710 = vmatprep.subr.mxu0 0.0
  %1711 = vmatpush1.msra.mxu0 0.0
  %1712 = vmatprep.subr.mxu0 0.0
  %1713 = vmatpush1.msra.mxu0 0.0
  %1714 = vmatprep.subr.mxu0 0.0
  %1715 = vmatpush1.msra.mxu0 0.0
  %1716 = vmatprep.subr.mxu0 0.0
  %1717 = vmatpush1.msra.mxu0 0.0
  %1718 = vmatprep.subr.mxu0 0.0
  %1719 = vmatpush1.msra.mxu0 0.0
  %1720 = vmatprep.subr.mxu0 0.0
  %1721 = vmatpush1.msra.mxu0 0.0
  %1722 = vmatprep.subr.mxu0 0.0
  %1723 = vmatpush1.msra.mxu0 0.0
  %1724 = vmatprep.subr.mxu0 0.0
  %1725 = vmatpush1.msra.mxu0 0.0
  %1726 = vmatprep.subr.mxu0 0.0
  %1727 = vmatpush1.msra.mxu0 0.0
  %1728 = vmatprep.subr.mxu0 0.0
  %1729 = vmatpush1.msra.mxu0 0.0
  %1730 = vmatprep.subr.mxu0 0.0
  %1731 = vmatpush1.msra.mxu0 0.0
  %1732 = vmatprep.subr.mxu0 0.0
  %1733 = vmatpush1.msra.mxu0 0.0
  %1734 = vmatprep.subr.mxu0 0.0
  %1735 = vmatpush1.msra.mxu0 0.0
  %1736 = vmatprep.subr.mxu0 0.0
  %1737 = vmatpush1.msra.mxu0 0.0
  %1738 = vmatprep.subr.mxu0 0.0
  %1739 = vmatpush1.msra.mxu0 0.0
  %1740 = vmatprep.subr.mxu0 0.0
  %1741 = vmatpush1.msra.mxu0 0.0
  %1742 = vmatprep.subr.mxu0 0.0
  %1743 = vmatpush1.msra.mxu0 0.0
  %1744 = vmatprep.subr.mxu0 0.0
  %1745 = vmatpush1.msra.mxu0 0.0
  %1746 = vmatprep.subr.mxu0 0.0
  %1747 = vmatpush1.msra.mxu0 0.0
  %1748 = vmatprep.subr.mxu0 0.0
  %1749 = vmatpush1.msra.mxu0 0.0
  %1750 = vmatprep.subr.mxu0 0.0
  %1751 = vmatpush1.msra.mxu0 0.0
  %1752 = vmatprep.subr.mxu0 0.0
  %1753 = vmatpush1.msra.mxu0 0.0
  %1754 = vmatprep.subr.mxu0 0.0
  %1755 = vmatpush1.msra.mxu0 0.0
  %1756 = vmatprep.subr.mxu0 0.0
  %1757 = vmatpush1.msra.mxu0 0.0
  %1758 = vmatprep.mubr.f32.mxu0 0.0
  %1759 = vmatmul.mubr.f32.gmra.mrb[0].mxu0 %v1692
  %v1760 = vpop.f32.mrb[0].mxu0
  %v1761 = vadd.f32 %v1687, %v1760
  %v1762 = vpop.f32.mrb[0].mxu0
  %1763 = vdwg.mxu0
  %vm1764 = vcmask 31744
  %1765 = vst.msk [vmem:[%s5] sm:$0xff] %vm1764, %v1761
  // Predicated region
  $region22: #{tpu_custom_call.1} parent=0 // pred_check
    _
  $region23: #{tpu_custom_call.1} parent=0 // pred_check_branch
    %1767 = sbr.rel (0) target = $region25
  $region24: #{tpu_custom_call.1} parent=0 // pred_region
    _
  $region25: #{tpu_custom_call.1} parent=0 // pred_fallthru
    _
  // Predicated region
  $region26: #{tpu_custom_call.1} parent=0 // pred_check
    _
  $region27: #{tpu_custom_call.1} parent=0 // pred_check_branch
    %1769 = sbr.rel (0) target = $region29
  $region28: #{tpu_custom_call.1} parent=0 // pred_region
    _
  $region29: #{tpu_custom_call.1} parent=0 // pred_fallthru
    _

</llo_original>
